<compile_context>
chip_gen: v5e
topology: v5e:2x2
jax: 0.10.0
libtpu: 0.0.40
codegen_flags: <defaults>
</compile_context>

<pallas_src>
from functools import partial

import jax
import jax.numpy as jnp
from jax import lax
from jax.experimental import pallas as pl
from jax.experimental.pallas import tpu as pltpu


def _round_up(v, m):
    return ((v + m - 1) // m) * m


def _conv_im2col_kernel(x_ref, xh_ref, w_ref, b_ref, out_ref, patches_ref, *,
                        offsets, cin, s_tile, apply_relu):
    """One (sample, spatial-tile) step of a VALID Conv3d (+ optional ReLU).

    x_ref   : (Cin, S_TILE)        f32   flat x, tile t
    xh_ref  : (Cin, S_TILE)        f32   flat x, halo tile t+1
    w_ref   : (Cout, K^3*Cin)      bf16  column = off*Cin + ci
    b_ref   : (Cout, 1)            f32
    out_ref : (Cout, S_TILE)       f32   flat output (input-grid strides)
    patches_ref : (K^3*Cin, S_TILE) bf16 VMEM scratch (im2col, built in-kernel)
    """
    # Tile + halo, cast once to bf16 (MXU operand dtype).
    xx = jnp.concatenate([x_ref[...], xh_ref[...]], axis=-1)  # (Cin, 2*S_TILE)
    xx = xx.astype(patches_ref.dtype)

    # Build the im2col patch matrix in VMEM: row off*Cin + ci is the flat
    # volume shifted by the (static) offset of that kernel tap.
    for i, delta in enumerate(offsets):
        patches_ref[i * cin:(i + 1) * cin, :] = xx[:, delta:delta + s_tile]

    # Single lane-dense GEMM on the MXU, f32 accumulation.
    acc = jnp.dot(w_ref[...], patches_ref[...],
                  preferred_element_type=jnp.float32)
    acc = acc + b_ref[...]
    if apply_relu:
        acc = jnp.maximum(acc, 0.0)
    out_ref[...] = acc.astype(out_ref.dtype)


def conv3d_valid(x, w, b, *, apply_relu, max_tile=1024):
    """VALID 3-D convolution (+ optional ReLU) of NCDHW `x` with OIDHW `w`."""
    N, cin, D, H, W = x.shape
    cout, cin_w, k, k2, k3 = w.shape
    assert cin_w == cin and k == k2 == k3
    Do, Ho, Wo = D - k + 1, H - k + 1, W - k + 1
    L = D * H * W
    K3 = k * k * k

    # Flat shifts (input-grid strides) for every kernel tap.
    offsets = tuple(kd * H * W + kh * W + kw
                    for kd in range(k) for kh in range(k) for kw in range(k))
    shift_max = offsets[-1]

    # Spatial tile: multiple of 128 (lane-dense) and >= the largest shift so a
    # single halo block (t+1) covers every shifted read of this tile.
    s_tile = _round_up(max(shift_max + 1, min(L, max_tile)), 128)
    T = -(-L // s_tile)
    l_pad = (T + 1) * s_tile  # one extra zero tile = halo for the last tile

    x_flat = jnp.pad(x.reshape(N, cin, L).astype(jnp.float32),
                     ((0, 0), (0, 0), (0, l_pad - L)))

    # (Cout, K^3*Cin) weights, column index = off*Cin + ci  (bf16 MXU operand).
    w2 = jnp.transpose(w, (0, 2, 3, 4, 1)).reshape(cout, K3 * cin)
    w2 = w2.astype(jnp.bfloat16)
    b2 = b.reshape(cout, 1).astype(jnp.float32)

    kernel = partial(_conv_im2col_kernel, offsets=offsets, cin=cin,
                     s_tile=s_tile, apply_relu=apply_relu)

    out_flat = pl.pallas_call(
        kernel,
        out_shape=jax.ShapeDtypeStruct((N, cout, T * s_tile), jnp.float32),
        grid=(N, T),
        in_specs=[
            pl.BlockSpec((None, cin, s_tile), lambda n, t: (n, 0, t)),      # x tile
            pl.BlockSpec((None, cin, s_tile), lambda n, t: (n, 0, t + 1)),  # halo
            pl.BlockSpec((cout, K3 * cin), lambda n, t: (0, 0)),            # weights
            pl.BlockSpec((cout, 1), lambda n, t: (0, 0)),                   # bias
        ],
        out_specs=pl.BlockSpec((None, cout, s_tile), lambda n, t: (n, 0, t)),
        scratch_shapes=[pltpu.VMEM((K3 * cin, s_tile), jnp.bfloat16)],
        compiler_params=pltpu.CompilerParams(
            dimension_semantics=("parallel", "parallel"),
            vmem_limit_bytes=64 * 1024 * 1024),
    )(x_flat, x_flat, w2, b2)

    # out_flat is addressed with *input*-grid strides: crop to the valid region.
    out_full = out_flat[:, :, :L].reshape(N, cout, D, H, W)
    return out_full[:, :, :Do, :Ho, :Wo]


def deep_vessel_net_forward(x, params, *, kernels):
    """DeepVesselNet forward (default config: conv+ReLU stack, final bare conv)."""
    depth = len(kernels)
    for i in range(depth):
        x = conv3d_valid(x, params[f"w{i}"], params[f"b{i}"],
                         apply_relu=(i < depth - 1))
    return x


def deep_vessel_net_reference(x, params, *, kernels):
    """Pure-JAX reference matching the PyTorch module (NCDHW, f32)."""
    depth = len(kernels)
    for i in range(depth):
        w = params[f"w{i}"]
        b = params[f"b{i}"]
        x = lax.conv_general_dilated(
            x, w, window_strides=(1, 1, 1), padding="VALID",
            dimension_numbers=("NCDHW", "OIDHW", "NCDHW"),
            precision=lax.Precision.HIGHEST)
        x = x + b.reshape(1, -1, 1, 1, 1)
        if i < depth - 1:
            x = jnp.maximum(x, 0.0)
    return x


if __name__ == "__main__":
    # Default DeepVesselNet config.
    in_channels = 2
    channels = [in_channels, 5, 10, 20, 50, 1]
    kernels = [3, 5, 5, 3, 1]
    N, D, H, W = 2, 16, 16, 16  # spatial must exceed total shrink of 12

    key = jax.random.PRNGKey(0)
    keys = jax.random.split(key, 2 * len(kernels) + 1)
    x = jax.random.normal(keys[0], (N, in_channels, D, H, W), jnp.float32)
    params = {}
    for i, k in enumerate(kernels):
        params[f"w{i}"] = 0.05 * jax.random.normal(
            keys[2 * i + 1], (channels[i + 1], channels[i], k, k, k), jnp.float32)
        params[f"b{i}"] = 0.05 * jax.random.normal(
            keys[2 * i + 2], (channels[i + 1],), jnp.float32)

    out = deep_vessel_net_forward(x, params, kernels=kernels)
    out = jax.block_until_ready(out)

    ref = deep_vessel_net_reference(x, params, kernels=kernels)
    shrink = sum(k - 1 for k in kernels)
    expected = (N, channels[-1], D - shrink, H - shrink, W - shrink)
    assert out.shape == ref.shape == expected, (out.shape, ref.shape, expected)
    if not jnp.allclose(out, ref, atol=2e-2, rtol=2e-2):
        raise AssertionError(
            "mismatch vs reference, max abs err = "
            f"{float(jnp.max(jnp.abs(out - ref)))}")
    print("KERNEL_OK")
</pallas_src>

<mosaic_0001>
module attributes {stable_mosaic.version = 11 : i64} {
  func.func @_conv_im2col_kernel(%arg0: i32, %arg1: i32, %arg2: memref<1x2x1024xf32, #tpu.memory_space<vmem>>, %arg3: memref<1x2x1024xf32, #tpu.memory_space<vmem>>, %arg4: memref<5x54xbf16, #tpu.memory_space<vmem>>, %arg5: memref<5x1xf32, #tpu.memory_space<vmem>>, %arg6: memref<1x5x1024xf32, #tpu.memory_space<vmem>>, %arg7: memref<54x1024xbf16, #tpu.memory_space<vmem>>) attributes {dimension_semantics = [#tpu.dimension_semantics<parallel>, #tpu.dimension_semantics<parallel>], iteration_bounds = array<i64: 2, 4>, scalar_prefetch = 0 : i64, scratch_operands = 1 : i64, tpu.core_type = #tpu.core_type<tc>, window_params = [{transform_indices = @transform_0, window_bounds = array<i64: 1, 2, 1024>}, {transform_indices = @transform_1, window_bounds = array<i64: 1, 2, 1024>}, {pipeline_mode = #tpu.pipeline_mode<synchronous>, transform_indices = @transform_2, window_bounds = array<i64: 5, 54>}, {pipeline_mode = #tpu.pipeline_mode<synchronous>, transform_indices = @transform_3, window_bounds = array<i64: 5, 1>}, {transform_indices = @transform_4, window_bounds = array<i64: 1, 5, 1024>}]} {
    %c0 = arith.constant 0 : index
    %c0_0 = arith.constant 0 : index
    %c0_1 = arith.constant 0 : index
    %0 = vector.load %arg2[%c0, %c0_0, %c0_1] : memref<1x2x1024xf32, #tpu.memory_space<vmem>>, vector<1x2x1024xf32>
    %1 = vector.shape_cast %0 : vector<1x2x1024xf32> to vector<2x1024xf32>
    %c0_2 = arith.constant 0 : index
    %c0_3 = arith.constant 0 : index
    %c0_4 = arith.constant 0 : index
    %2 = vector.load %arg3[%c0_2, %c0_3, %c0_4] : memref<1x2x1024xf32, #tpu.memory_space<vmem>>, vector<1x2x1024xf32>
    %3 = vector.shape_cast %2 : vector<1x2x1024xf32> to vector<2x1024xf32>
    %4 = tpu.concatenate %1, %3 in 1 : vector<2x1024xf32>, vector<2x1024xf32> -> vector<2x2048xf32>
    %5 = arith.truncf %4 : vector<2x2048xf32> to vector<2x2048xbf16>
    %6 = vector.extract_strided_slice %5 {offsets = [0, 0], sizes = [2, 1024], strides = [1, 1]} : vector<2x2048xbf16> to vector<2x1024xbf16>
    %c0_5 = arith.constant 0 : index
    %c0_6 = arith.constant 0 : index
    %7 = vector.load %arg7[%c0_5, %c0_6] : memref<54x1024xbf16, #tpu.memory_space<vmem>>, vector<2x1024xbf16>
    tpu.vector_store %arg7[%c0_5, %c0_6], %6 {strides = array<i32>} : memref<54x1024xbf16, #tpu.memory_space<vmem>>, vector<2x1024xbf16>,
    %8 = vector.extract_strided_slice %5 {offsets = [0, 1], sizes = [2, 1024], strides = [1, 1]} : vector<2x2048xbf16> to vector<2x1024xbf16>
    %c2 = arith.constant 2 : index
    %c0_7 = arith.constant 0 : index
    %9 = vector.load %arg7[%c2, %c0_7] : memref<54x1024xbf16, #tpu.memory_space<vmem>>, vector<2x1024xbf16>
    tpu.vector_store %arg7[%c2, %c0_7], %8 {strides = array<i32>} : memref<54x1024xbf16, #tpu.memory_space<vmem>>, vector<2x1024xbf16>,
    %10 = vector.extract_strided_slice %5 {offsets = [0, 2], sizes = [2, 1024], strides = [1, 1]} : vector<2x2048xbf16> to vector<2x1024xbf16>
    %c4 = arith.constant 4 : index
    %c0_8 = arith.constant 0 : index
    %11 = vector.load %arg7[%c4, %c0_8] : memref<54x1024xbf16, #tpu.memory_space<vmem>>, vector<2x1024xbf16>
    tpu.vector_store %arg7[%c4, %c0_8], %10 {strides = array<i32>} : memref<54x1024xbf16, #tpu.memory_space<vmem>>, vector<2x1024xbf16>,
    %12 = vector.extract_strided_slice %5 {offsets = [0, 16], sizes = [2, 1024], strides = [1, 1]} : vector<2x2048xbf16> to vector<2x1024xbf16>
    %c6 = arith.constant 6 : index
    %c0_9 = arith.constant 0 : index
    %13 = vector.load %arg7[%c6, %c0_9] : memref<54x1024xbf16, #tpu.memory_space<vmem>>, vector<2x1024xbf16>
    tpu.vector_store %arg7[%c6, %c0_9], %12 {strides = array<i32>} : memref<54x1024xbf16, #tpu.memory_space<vmem>>, vector<2x1024xbf16>,
    %14 = vector.extract_strided_slice %5 {offsets = [0, 17], sizes = [2, 1024], strides = [1, 1]} : vector<2x2048xbf16> to vector<2x1024xbf16>
    %c8 = arith.constant 8 : index
    %c0_10 = arith.constant 0 : index
    %15 = vector.load %arg7[%c8, %c0_10] : memref<54x1024xbf16, #tpu.memory_space<vmem>>, vector<2x1024xbf16>
    tpu.vector_store %arg7[%c8, %c0_10], %14 {strides = array<i32>} : memref<54x1024xbf16, #tpu.memory_space<vmem>>, vector<2x1024xbf16>,
    %16 = vector.extract_strided_slice %5 {offsets = [0, 18], sizes = [2, 1024], strides = [1, 1]} : vector<2x2048xbf16> to vector<2x1024xbf16>
    %c10 = arith.constant 10 : index
    %c0_11 = arith.constant 0 : index
    %17 = vector.load %arg7[%c10, %c0_11] : memref<54x1024xbf16, #tpu.memory_space<vmem>>, vector<2x1024xbf16>
    tpu.vector_store %arg7[%c10, %c0_11], %16 {strides = array<i32>} : memref<54x1024xbf16, #tpu.memory_space<vmem>>, vector<2x1024xbf16>,
    %18 = vector.extract_strided_slice %5 {offsets = [0, 32], sizes = [2, 1024], strides = [1, 1]} : vector<2x2048xbf16> to vector<2x1024xbf16>
    %c12 = arith.constant 12 : index
    %c0_12 = arith.constant 0 : index
    %19 = vector.load %arg7[%c12, %c0_12] : memref<54x1024xbf16, #tpu.memory_space<vmem>>, vector<2x1024xbf16>
    tpu.vector_store %arg7[%c12, %c0_12], %18 {strides = array<i32>} : memref<54x1024xbf16, #tpu.memory_space<vmem>>, vector<2x1024xbf16>,
    %20 = vector.extract_strided_slice %5 {offsets = [0, 33], sizes = [2, 1024], strides = [1, 1]} : vector<2x2048xbf16> to vector<2x1024xbf16>
    %c14 = arith.constant 14 : index
    %c0_13 = arith.constant 0 : index
    %21 = vector.load %arg7[%c14, %c0_13] : memref<54x1024xbf16, #tpu.memory_space<vmem>>, vector<2x1024xbf16>
    tpu.vector_store %arg7[%c14, %c0_13], %20 {strides = array<i32>} : memref<54x1024xbf16, #tpu.memory_space<vmem>>, vector<2x1024xbf16>,
    %22 = vector.extract_strided_slice %5 {offsets = [0, 34], sizes = [2, 1024], strides = [1, 1]} : vector<2x2048xbf16> to vector<2x1024xbf16>
    %c16 = arith.constant 16 : index
    %c0_14 = arith.constant 0 : index
    %23 = vector.load %arg7[%c16, %c0_14] : memref<54x1024xbf16, #tpu.memory_space<vmem>>, vector<2x1024xbf16>
    tpu.vector_store %arg7[%c16, %c0_14], %22 {strides = array<i32>} : memref<54x1024xbf16, #tpu.memory_space<vmem>>, vector<2x1024xbf16>,
    %24 = vector.extract_strided_slice %5 {offsets = [0, 256], sizes = [2, 1024], strides = [1, 1]} : vector<2x2048xbf16> to vector<2x1024xbf16>
    %c18 = arith.constant 18 : index
    %c0_15 = arith.constant 0 : index
    %25 = vector.load %arg7[%c18, %c0_15] : memref<54x1024xbf16, #tpu.memory_space<vmem>>, vector<2x1024xbf16>
    tpu.vector_store %arg7[%c18, %c0_15], %24 {strides = array<i32>} : memref<54x1024xbf16, #tpu.memory_space<vmem>>, vector<2x1024xbf16>,
    %26 = vector.extract_strided_slice %5 {offsets = [0, 257], sizes = [2, 1024], strides = [1, 1]} : vector<2x2048xbf16> to vector<2x1024xbf16>
    %c20 = arith.constant 20 : index
    %c0_16 = arith.constant 0 : index
    %27 = vector.load %arg7[%c20, %c0_16] : memref<54x1024xbf16, #tpu.memory_space<vmem>>, vector<2x1024xbf16>
    tpu.vector_store %arg7[%c20, %c0_16], %26 {strides = array<i32>} : memref<54x1024xbf16, #tpu.memory_space<vmem>>, vector<2x1024xbf16>,
    %28 = vector.extract_strided_slice %5 {offsets = [0, 258], sizes = [2, 1024], strides = [1, 1]} : vector<2x2048xbf16> to vector<2x1024xbf16>
    %c22 = arith.constant 22 : index
    %c0_17 = arith.constant 0 : index
    %29 = vector.load %arg7[%c22, %c0_17] : memref<54x1024xbf16, #tpu.memory_space<vmem>>, vector<2x1024xbf16>
    tpu.vector_store %arg7[%c22, %c0_17], %28 {strides = array<i32>} : memref<54x1024xbf16, #tpu.memory_space<vmem>>, vector<2x1024xbf16>,
    %30 = vector.extract_strided_slice %5 {offsets = [0, 272], sizes = [2, 1024], strides = [1, 1]} : vector<2x2048xbf16> to vector<2x1024xbf16>
    %c24 = arith.constant 24 : index
    %c0_18 = arith.constant 0 : index
    %31 = vector.load %arg7[%c24, %c0_18] : memref<54x1024xbf16, #tpu.memory_space<vmem>>, vector<2x1024xbf16>
    tpu.vector_store %arg7[%c24, %c0_18], %30 {strides = array<i32>} : memref<54x1024xbf16, #tpu.memory_space<vmem>>, vector<2x1024xbf16>,
    %32 = vector.extract_strided_slice %5 {offsets = [0, 273], sizes = [2, 1024], strides = [1, 1]} : vector<2x2048xbf16> to vector<2x1024xbf16>
    %c26 = arith.constant 26 : index
    %c0_19 = arith.constant 0 : index
    %33 = vector.load %arg7[%c26, %c0_19] : memref<54x1024xbf16, #tpu.memory_space<vmem>>, vector<2x1024xbf16>
    tpu.vector_store %arg7[%c26, %c0_19], %32 {strides = array<i32>} : memref<54x1024xbf16, #tpu.memory_space<vmem>>, vector<2x1024xbf16>,
    %34 = vector.extract_strided_slice %5 {offsets = [0, 274], sizes = [2, 1024], strides = [1, 1]} : vector<2x2048xbf16> to vector<2x1024xbf16>
    %c28 = arith.constant 28 : index
    %c0_20 = arith.constant 0 : index
    %35 = vector.load %arg7[%c28, %c0_20] : memref<54x1024xbf16, #tpu.memory_space<vmem>>, vector<2x1024xbf16>
    tpu.vector_store %arg7[%c28, %c0_20], %34 {strides = array<i32>} : memref<54x1024xbf16, #tpu.memory_space<vmem>>, vector<2x1024xbf16>,
    %36 = vector.extract_strided_slice %5 {offsets = [0, 288], sizes = [2, 1024], strides = [1, 1]} : vector<2x2048xbf16> to vector<2x1024xbf16>
    %c30 = arith.constant 30 : index
    %c0_21 = arith.constant 0 : index
    %37 = vector.load %arg7[%c30, %c0_21] : memref<54x1024xbf16, #tpu.memory_space<vmem>>, vector<2x1024xbf16>
    tpu.vector_store %arg7[%c30, %c0_21], %36 {strides = array<i32>} : memref<54x1024xbf16, #tpu.memory_space<vmem>>, vector<2x1024xbf16>,
    %38 = vector.extract_strided_slice %5 {offsets = [0, 289], sizes = [2, 1024], strides = [1, 1]} : vector<2x2048xbf16> to vector<2x1024xbf16>
    %c32 = arith.constant 32 : index
    %c0_22 = arith.constant 0 : index
    %39 = vector.load %arg7[%c32, %c0_22] : memref<54x1024xbf16, #tpu.memory_space<vmem>>, vector<2x1024xbf16>
    tpu.vector_store %arg7[%c32, %c0_22], %38 {strides = array<i32>} : memref<54x1024xbf16, #tpu.memory_space<vmem>>, vector<2x1024xbf16>,
    %40 = vector.extract_strided_slice %5 {offsets = [0, 290], sizes = [2, 1024], strides = [1, 1]} : vector<2x2048xbf16> to vector<2x1024xbf16>
    %c34 = arith.constant 34 : index
    %c0_23 = arith.constant 0 : index
    %41 = vector.load %arg7[%c34, %c0_23] : memref<54x1024xbf16, #tpu.memory_space<vmem>>, vector<2x1024xbf16>
    tpu.vector_store %arg7[%c34, %c0_23], %40 {strides = array<i32>} : memref<54x1024xbf16, #tpu.memory_space<vmem>>, vector<2x1024xbf16>,
    %42 = vector.extract_strided_slice %5 {offsets = [0, 512], sizes = [2, 1024], strides = [1, 1]} : vector<2x2048xbf16> to vector<2x1024xbf16>
    %c36 = arith.constant 36 : index
    %c0_24 = arith.constant 0 : index
    %43 = vector.load %arg7[%c36, %c0_24] : memref<54x1024xbf16, #tpu.memory_space<vmem>>, vector<2x1024xbf16>
    tpu.vector_store %arg7[%c36, %c0_24], %42 {strides = array<i32>} : memref<54x1024xbf16, #tpu.memory_space<vmem>>, vector<2x1024xbf16>,
    %44 = vector.extract_strided_slice %5 {offsets = [0, 513], sizes = [2, 1024], strides = [1, 1]} : vector<2x2048xbf16> to vector<2x1024xbf16>
    %c38 = arith.constant 38 : index
    %c0_25 = arith.constant 0 : index
    %45 = vector.load %arg7[%c38, %c0_25] : memref<54x1024xbf16, #tpu.memory_space<vmem>>, vector<2x1024xbf16>
    tpu.vector_store %arg7[%c38, %c0_25], %44 {strides = array<i32>} : memref<54x1024xbf16, #tpu.memory_space<vmem>>, vector<2x1024xbf16>,
    %46 = vector.extract_strided_slice %5 {offsets = [0, 514], sizes = [2, 1024], strides = [1, 1]} : vector<2x2048xbf16> to vector<2x1024xbf16>
    %c40 = arith.constant 40 : index
    %c0_26 = arith.constant 0 : index
    %47 = vector.load %arg7[%c40, %c0_26] : memref<54x1024xbf16, #tpu.memory_space<vmem>>, vector<2x1024xbf16>
    tpu.vector_store %arg7[%c40, %c0_26], %46 {strides = array<i32>} : memref<54x1024xbf16, #tpu.memory_space<vmem>>, vector<2x1024xbf16>,
    %48 = vector.extract_strided_slice %5 {offsets = [0, 528], sizes = [2, 1024], strides = [1, 1]} : vector<2x2048xbf16> to vector<2x1024xbf16>
    %c42 = arith.constant 42 : index
    %c0_27 = arith.constant 0 : index
    %49 = vector.load %arg7[%c42, %c0_27] : memref<54x1024xbf16, #tpu.memory_space<vmem>>, vector<2x1024xbf16>
    tpu.vector_store %arg7[%c42, %c0_27], %48 {strides = array<i32>} : memref<54x1024xbf16, #tpu.memory_space<vmem>>, vector<2x1024xbf16>,
    %50 = vector.extract_strided_slice %5 {offsets = [0, 529], sizes = [2, 1024], strides = [1, 1]} : vector<2x2048xbf16> to vector<2x1024xbf16>
    %c44 = arith.constant 44 : index
    %c0_28 = arith.constant 0 : index
    %51 = vector.load %arg7[%c44, %c0_28] : memref<54x1024xbf16, #tpu.memory_space<vmem>>, vector<2x1024xbf16>
    tpu.vector_store %arg7[%c44, %c0_28], %50 {strides = array<i32>} : memref<54x1024xbf16, #tpu.memory_space<vmem>>, vector<2x1024xbf16>,
    %52 = vector.extract_strided_slice %5 {offsets = [0, 530], sizes = [2, 1024], strides = [1, 1]} : vector<2x2048xbf16> to vector<2x1024xbf16>
    %c46 = arith.constant 46 : index
    %c0_29 = arith.constant 0 : index
    %53 = vector.load %arg7[%c46, %c0_29] : memref<54x1024xbf16, #tpu.memory_space<vmem>>, vector<2x1024xbf16>
    tpu.vector_store %arg7[%c46, %c0_29], %52 {strides = array<i32>} : memref<54x1024xbf16, #tpu.memory_space<vmem>>, vector<2x1024xbf16>,
    %54 = vector.extract_strided_slice %5 {offsets = [0, 544], sizes = [2, 1024], strides = [1, 1]} : vector<2x2048xbf16> to vector<2x1024xbf16>
    %c48 = arith.constant 48 : index
    %c0_30 = arith.constant 0 : index
    %55 = vector.load %arg7[%c48, %c0_30] : memref<54x1024xbf16, #tpu.memory_space<vmem>>, vector<2x1024xbf16>
    tpu.vector_store %arg7[%c48, %c0_30], %54 {strides = array<i32>} : memref<54x1024xbf16, #tpu.memory_space<vmem>>, vector<2x1024xbf16>,
    %56 = vector.extract_strided_slice %5 {offsets = [0, 545], sizes = [2, 1024], strides = [1, 1]} : vector<2x2048xbf16> to vector<2x1024xbf16>
    %c50 = arith.constant 50 : index
    %c0_31 = arith.constant 0 : index
    %57 = vector.load %arg7[%c50, %c0_31] : memref<54x1024xbf16, #tpu.memory_space<vmem>>, vector<2x1024xbf16>
    tpu.vector_store %arg7[%c50, %c0_31], %56 {strides = array<i32>} : memref<54x1024xbf16, #tpu.memory_space<vmem>>, vector<2x1024xbf16>,
    %58 = vector.extract_strided_slice %5 {offsets = [0, 546], sizes = [2, 1024], strides = [1, 1]} : vector<2x2048xbf16> to vector<2x1024xbf16>
    %c52 = arith.constant 52 : index
    %c0_32 = arith.constant 0 : index
    %59 = vector.load %arg7[%c52, %c0_32] : memref<54x1024xbf16, #tpu.memory_space<vmem>>, vector<2x1024xbf16>
    tpu.vector_store %arg7[%c52, %c0_32], %58 {strides = array<i32>} : memref<54x1024xbf16, #tpu.memory_space<vmem>>, vector<2x1024xbf16>,
    %c0_33 = arith.constant 0 : index
    %c0_34 = arith.constant 0 : index
    %60 = vector.load %arg4[%c0_33, %c0_34] : memref<5x54xbf16, #tpu.memory_space<vmem>>, vector<5x54xbf16>
    %c0_35 = arith.constant 0 : index
    %c0_36 = arith.constant 0 : index
    %61 = vector.load %arg7[%c0_35, %c0_36] : memref<54x1024xbf16, #tpu.memory_space<vmem>>, vector<54x1024xbf16>
    %cst = arith.constant dense<0.000000e+00> : vector<5x1024xf32>
    %62 = tpu.matmul %60, %61, %cst {dimension_numbers = #tpu.dot_dimension_numbers<[1], [0], [0], [1], [0, 0, 1, 1], [], []>} : vector<5x54xbf16>, vector<54x1024xbf16>, vector<5x1024xf32> -> vector<5x1024xf32>
    %c0_37 = arith.constant 0 : index
    %c0_38 = arith.constant 0 : index
    %63 = vector.load %arg5[%c0_37, %c0_38] : memref<5x1xf32, #tpu.memory_space<vmem>>, vector<5x1xf32>
    %64 = vector.broadcast %63 : vector<5x1xf32> to vector<5x1024xf32>
    %65 = arith.addf %62, %64 : vector<5x1024xf32>
    %cst_39 = arith.constant 0.000000e+00 : f32
    %66 = vector.broadcast %cst_39 : f32 to vector<5x1024xf32>
    %67 = arith.maximumf %65, %66 : vector<5x1024xf32>
    %c0_40 = arith.constant 0 : index
    %c0_41 = arith.constant 0 : index
    %c0_42 = arith.constant 0 : index
    %68 = vector.load %arg6[%c0_40, %c0_41, %c0_42] : memref<1x5x1024xf32, #tpu.memory_space<vmem>>, vector<1x5x1024xf32>
    %69 = vector.shape_cast %68 : vector<1x5x1024xf32> to vector<5x1024xf32>
    %70 = vector.shape_cast %67 : vector<5x1024xf32> to vector<1x5x1024xf32>
    tpu.vector_store %arg6[%c0_40, %c0_41, %c0_42], %70 {strides = array<i32>} : memref<1x5x1024xf32, #tpu.memory_space<vmem>>, vector<1x5x1024xf32>,
    return
  }
  func.func @transform_0(%arg0: i32, %arg1: i32) -> (i32, i32, i32) {
    %c0_i32 = arith.constant 0 : i32
    %c0_i32_0 = arith.constant 0 : i32
    return %arg0, %c0_i32, %arg1 : i32, i32, i32
  }
  func.func @transform_1(%arg0: i32, %arg1: i32) -> (i32, i32, i32) {
    %c1_i32 = arith.constant 1 : i32
    %0 = arith.addi %arg1, %c1_i32 : i32
    %c0_i32 = arith.constant 0 : i32
    %c0_i32_0 = arith.constant 0 : i32
    return %arg0, %c0_i32, %0 : i32, i32, i32
  }
  func.func @transform_2(%arg0: i32, %arg1: i32) -> (i32, i32) {
    %c0_i32 = arith.constant 0 : i32
    %c0_i32_0 = arith.constant 0 : i32
    %c0_i32_1 = arith.constant 0 : i32
    return %c0_i32, %c0_i32_0 : i32, i32
  }
  func.func @transform_3(%arg0: i32, %arg1: i32) -> (i32, i32) {
    %c0_i32 = arith.constant 0 : i32
    %c0_i32_0 = arith.constant 0 : i32
    %c0_i32_1 = arith.constant 0 : i32
    return %c0_i32, %c0_i32_0 : i32, i32
  }
  func.func @transform_4(%arg0: i32, %arg1: i32) -> (i32, i32, i32) {
    %c0_i32 = arith.constant 0 : i32
    %c0_i32_0 = arith.constant 0 : i32
    return %arg0, %c0_i32, %arg1 : i32, i32, i32
  }
}

</mosaic_0001>

<llo_original>
// kernel: tpu_custom_call.1
$region0: #{tpu_custom_call.1}
  #allocation0 [shape = 'u32[]', space=smem, size = 0x4, offset = 0x4, fixed_abs, tag = 'smem constant byte address 0x4 - core index']
  #allocation1 [shape = 'u32[72,128]{1,0:T(1,128)}', space=vmem, size = 0x9000, scoped, tag = 'internal scratch']
  #allocation2 [shape = 'bf16[54,1024]{1,0:T(8,128)(2,1)}', space=vmem, size = 0x1c000, scoped, tag = 'scratch operand']
  %s0 = inlined_call_operand.hbm [shape: f32[2,2,5120], index: 0, kind: input, shape index: {}]
  %s1 = inlined_call_operand.hbm [shape: f32[2,2,5120], index: 1, kind: input, shape index: {}]
  %s2 = inlined_call_operand.vmem [shape: bf16[5,54], index: 2, kind: input, shape index: {}]
  %s3 = inlined_call_operand.vmem [shape: f32[5,1], index: 3, kind: input, shape index: {}]
  %s4 = inlined_call_operand.vmem [shape: f32[2,5,4096], index: 4, kind: output, shape index: {}]
  %s5 = sld [smem:[#allocation0]]
  $region57: #{tpu_custom_call.1} parent=0
    _
  %s7 = ssub.s32 1, %s5
  %s8 = scalar_select 0, %s7, %s5
  $region1: #{tpu_custom_call.1} parent=0
    #allocation3 [shape = 'u8[16384]{0}', space=vmem, size = 0x4000, scoped, tag = 'input window, operand 0']
    #allocation4 [shape = 's32[2]{0}', space=sflag, size = 0x8, scoped, tag = 'scoped memory for tpu_custom_call.1']
    #allocation5 [shape = 'u8[16384]{0}', space=vmem, size = 0x4000, scoped, tag = 'input window, operand 1']
    #allocation6 [shape = 's32[2]{0}', space=sflag, size = 0x8, scoped, tag = 'scoped memory for tpu_custom_call.1']
    %9 = vsyncpa [#allocation4], 0
    %s10 = scalar_lea.sflag [#allocation4], 1
    %11 = vsyncpa %s10, 0
    %12 = vsyncpa [#allocation6], 0
    %s13 = scalar_lea.sflag [#allocation6], 1
    %14 = vsyncpa %s13, 0
    loop: start=0, step=1, limit=10
    $region2: #{tpu_custom_call.1} parent=1 // loop_pre_header
      _
    $region3: #{tpu_custom_call.1} parent=1 // loop_header
      %s16 = sphi 0, %s20
      %p17 = scmp.ge.s32.totalorder %s16, 10
      %s23 = sphi 0, %s35
      %s24 = sphi 0, %s31
      %s25 = sphi 0, %s23
      %s26 = sphi 0, %s24
      %s27 = sphi 0, %s25
      %s28 = sphi 0, %s26
      %s40 = sphi 0, %s42
      %s43 = sphi 0, %s40
      %s44 = sphi 0, %s43
      %s60 = sphi 0, %s44
      %s70 = sphi 0, %s72
      %s73 = sphi 0, %s70
      %s74 = sphi 0, %s73
      %s90 = sphi 0, %s74
      %s94 = sphi 0, %s94
      %s96 = sphi 0, %s94
      %s97 = sphi 0, %s96
      %s111 = sphi 0, %s97
      %s115 = sphi 0, %s115
      %s117 = sphi 0, %s115
      %s118 = sphi 0, %s117
      %s132 = sphi 0, %s118
      %s140 = sphi 0, %s142
      %s143 = sphi 0, %s140
      %s144 = sphi 0, %s143
      %s160 = sphi 0, %s144
    $region4: #{tpu_custom_call.1} parent=1 // loop_header_branch
      %19 = sbr.rel (%p17) target = $region8
    $region5: #{tpu_custom_call.1} parent=1 // loop_body
      %s21 = ssub.s32 %s16, 1
      %s22 = ssub.s32 %s16, 2
      %s29 = sadd.s32 1, %s24
      %p30 = scmp.ge.s32.totalorder %s29, 4
      %s31 = scalar_select %p30, 0, %s29
      %s32 = sadd.s32 1, %s23
      %s33 = scalar_select %p30, %s32, %s23
      %p34 = scmp.ge.s32.totalorder %s33, 2
      %s35 = scalar_select %p34, 0, %s33
      %s36 = ssub.s32 %s23, %s35
      %s37 = ssub.s32 %s24, %s31
      %s38 = sor.u32 %s36, %s37
      %p39 = scmp.eq.s32.totalorder %s38, 0
      %s41 = sadd.s32 %s40, 1
      %s42 = scalar_select %p39, %s40, %s41
      %p45 = pneg %p39
      %p46 = scmp.eq.s32.totalorder %s16, 7
      %p47 = por %p45, %p46
      %p48 = scmp.ne.s32.totalorder %s40, %s43
      %p49 = scmp.eq.s32.totalorder %s16, 0
      %p50 = por %p48, %p49
      %p51 = scmp.ne.s32.totalorder %s40, %s43
      %p52 = scmp.eq.s32.totalorder %s21, 7
      %p53 = por %p51, %p52
      %p54 = scmp.ne.s32.totalorder %s43, %s44
      %p55 = scmp.eq.s32.totalorder %s21, 0
      %p56 = por %p54, %p55
      %p57 = scmp.ne.s32.totalorder %s43, %s44
      %p58 = scmp.eq.s32.totalorder %s22, 7
      %p59 = por %p57, %p58
      %p61 = scmp.ne.s32.totalorder %s44, %s60
      %p62 = scmp.eq.s32.totalorder %s22, 0
      %p63 = por %p61, %p62
      %s64 = sadd.s32 %s24, 1
      %s65 = sadd.s32 %s31, 1
      %s66 = ssub.s32 %s23, %s35
      %s67 = ssub.s32 %s64, %s65
      %s68 = sor.u32 %s66, %s67
      %p69 = scmp.eq.s32.totalorder %s68, 0
      %s71 = sadd.s32 %s70, 1
      %s72 = scalar_select %p69, %s70, %s71
      %p75 = pneg %p69
      %p76 = scmp.eq.s32.totalorder %s16, 7
      %p77 = por %p75, %p76
      %p78 = scmp.ne.s32.totalorder %s70, %s73
      %p79 = scmp.eq.s32.totalorder %s16, 0
      %p80 = por %p78, %p79
      %p81 = scmp.ne.s32.totalorder %s70, %s73
      %p82 = scmp.eq.s32.totalorder %s21, 7
      %p83 = por %p81, %p82
      %p84 = scmp.ne.s32.totalorder %s73, %s74
      %p85 = scmp.eq.s32.totalorder %s21, 0
      %p86 = por %p84, %p85
      %p87 = scmp.ne.s32.totalorder %s73, %s74
      %p88 = scmp.eq.s32.totalorder %s22, 7
      %p89 = por %p87, %p88
      %p91 = scmp.ne.s32.totalorder %s74, %s90
      %p92 = scmp.eq.s32.totalorder %s22, 0
      %p93 = por %p91, %p92
      %s95 = sadd.s32 %s94, 1
      %p98 = scmp.eq.s32.totalorder %s16, 7
      %p99 = scmp.ne.s32.totalorder %s94, %s96
      %p100 = scmp.eq.s32.totalorder %s16, 0
      %p101 = por %p99, %p100
      %p102 = scmp.ne.s32.totalorder %s94, %s96
      %p103 = scmp.eq.s32.totalorder %s21, 7
      %p104 = por %p102, %p103
      %p105 = scmp.ne.s32.totalorder %s96, %s97
      %p106 = scmp.eq.s32.totalorder %s21, 0
      %p107 = por %p105, %p106
      %p108 = scmp.ne.s32.totalorder %s96, %s97
      %p109 = scmp.eq.s32.totalorder %s22, 7
      %p110 = por %p108, %p109
      %p112 = scmp.ne.s32.totalorder %s97, %s111
      %p113 = scmp.eq.s32.totalorder %s22, 0
      %p114 = por %p112, %p113
      %s116 = sadd.s32 %s115, 1
      %p119 = scmp.eq.s32.totalorder %s16, 7
      %p120 = scmp.ne.s32.totalorder %s115, %s117
      %p121 = scmp.eq.s32.totalorder %s16, 0
      %p122 = por %p120, %p121
      %p123 = scmp.ne.s32.totalorder %s115, %s117
      %p124 = scmp.eq.s32.totalorder %s21, 7
      %p125 = por %p123, %p124
      %p126 = scmp.ne.s32.totalorder %s117, %s118
      %p127 = scmp.eq.s32.totalorder %s21, 0
      %p128 = por %p126, %p127
      %p129 = scmp.ne.s32.totalorder %s117, %s118
      %p130 = scmp.eq.s32.totalorder %s22, 7
      %p131 = por %p129, %p130
      %p133 = scmp.ne.s32.totalorder %s118, %s132
      %p134 = scmp.eq.s32.totalorder %s22, 0
      %p135 = por %p133, %p134
      %s136 = ssub.s32 %s23, %s35
      %s137 = ssub.s32 %s24, %s31
      %s138 = sor.u32 %s136, %s137
      %p139 = scmp.eq.s32.totalorder %s138, 0
      %s141 = sadd.s32 %s140, 1
      %s142 = scalar_select %p139, %s140, %s141
      %p145 = pneg %p139
      %p146 = scmp.eq.s32.totalorder %s16, 7
      %p147 = por %p145, %p146
      %p148 = scmp.ne.s32.totalorder %s140, %s143
      %p149 = scmp.eq.s32.totalorder %s16, 0
      %p150 = por %p148, %p149
      %p151 = scmp.ne.s32.totalorder %s140, %s143
      %p152 = scmp.eq.s32.totalorder %s21, 7
      %p153 = por %p151, %p152
      %p154 = scmp.ne.s32.totalorder %s143, %s144
      %p155 = scmp.eq.s32.totalorder %s21, 0
      %p156 = por %p154, %p155
      %p157 = scmp.ne.s32.totalorder %s143, %s144
      %p158 = scmp.eq.s32.totalorder %s22, 7
      %p159 = por %p157, %p158
      %p161 = scmp.ne.s32.totalorder %s144, %s160
      %p162 = scmp.eq.s32.totalorder %s22, 0
      %p163 = por %p161, %p162
      %p164 = scmp.le.s32.totalorder 1, %s16
      %p165 = scmp.lt.s32.totalorder %s16, 9
      %p166 = pnand %p164, %p165
      %p167 = pneg %p166
      // Predicated region
      $region9: #{tpu_custom_call.1} parent=5 // pred_check
        _
      $region10: #{tpu_custom_call.1} parent=5 // pred_check_branch
        %169 = sbr.rel (%p166) target = $region12
      $region11: #{tpu_custom_call.1} parent=5 // pred_region
        %s170 = ssub.s32 %s16, 1
        // Predicated region
        $region13: #{tpu_custom_call.1} parent=11 // pred_check
          %p171 = pneg %p107
        $region14: #{tpu_custom_call.1} parent=11 // pred_check_branch
          %173 = sbr.rel (%p171) target = $region16
        $region15: #{tpu_custom_call.1} parent=11 // pred_region
          _
        $region16: #{tpu_custom_call.1} parent=11 // pred_fallthru
          _
        // Predicated region
        $region17: #{tpu_custom_call.1} parent=11 // pred_check
          %p174 = pneg %p128
        $region18: #{tpu_custom_call.1} parent=11 // pred_check_branch
          %176 = sbr.rel (%p174) target = $region20
        $region19: #{tpu_custom_call.1} parent=11 // pred_region
          _
        $region20: #{tpu_custom_call.1} parent=11 // pred_fallthru
          _
      $region12: #{tpu_custom_call.1} parent=5 // pred_fallthru
        _
      %p177 = scmp.lt.s32.totalorder %s16, 8
      // Predicated region
      $region21: #{tpu_custom_call.1} parent=5 // pred_check
        %p178 = pneg %p177
      $region22: #{tpu_custom_call.1} parent=5 // pred_check_branch
        %180 = sbr.rel (%p178) target = $region24
      $region23: #{tpu_custom_call.1} parent=5 // pred_region
        // Predicated region
        $region25: #{tpu_custom_call.1} parent=23 // pred_check
          %p181 = pneg %p50
        $region26: #{tpu_custom_call.1} parent=23 // pred_check_branch
          %183 = sbr.rel (%p181) target = $region28
        $region27: #{tpu_custom_call.1} parent=23 // pred_region
          %s184 = sand.u32 %s40, 1
          %s185 = scalar_lea.sflag [#allocation4], %s184
          %s186 = sand.u32 %s40, 1
          %s187 = smul.addr %s186, 16
          %s188 = scalar_lea.vmem [#allocation3], %s187
          %s189 = smul.u32 8, %s24
          %191 = vsyncadd %s185, 0
          %s192 = smul.addr %s23, 40
          %s193 = sadd.s32 %s189, %s192
          %s194 = smul.addr %s193, 2
          %s195 = scalar_lea.hbm %s0, %s194
          %s197 = sshll.u32 %s195, 4
          %s198 = int_to_ptr.hbm [resolvable:$true] %s197
          %s199 = sshll.u32 %s188, 4
          %s200 = int_to_ptr.vmem [resolvable:$true] %s199
          %202 = dma.hbm_to_vmem [thread:$0]  %s198, 256, %s200, %s185
        $region28: #{tpu_custom_call.1} parent=23 // pred_fallthru
          _
        // Predicated region
        $region29: #{tpu_custom_call.1} parent=23 // pred_check
          %p203 = pneg %p80
        $region30: #{tpu_custom_call.1} parent=23 // pred_check_branch
          %205 = sbr.rel (%p203) target = $region32
        $region31: #{tpu_custom_call.1} parent=23 // pred_region
          %s206 = sand.u32 %s70, 1
          %s207 = scalar_lea.sflag [#allocation6], %s206
          %s208 = sand.u32 %s70, 1
          %s209 = smul.addr %s208, 16
          %s210 = scalar_lea.vmem [#allocation5], %s209
          %s211 = sadd.s32 %s24, 1
          %s212 = smul.u32 8, %s211
          %214 = vsyncadd %s207, 0
          %s215 = smul.addr %s23, 40
          %s216 = sadd.s32 %s212, %s215
          %s217 = smul.addr %s216, 2
          %s218 = scalar_lea.hbm %s1, %s217
          %s220 = sshll.u32 %s218, 4
          %s221 = int_to_ptr.hbm [resolvable:$true] %s220
          %s222 = sshll.u32 %s210, 4
          %s223 = int_to_ptr.vmem [resolvable:$true] %s222
          %225 = dma.hbm_to_vmem [thread:$0]  %s221, 256, %s223, %s207
        $region32: #{tpu_custom_call.1} parent=23 // pred_fallthru
          _
      $region24: #{tpu_custom_call.1} parent=5 // pred_fallthru
        _
      %p226 = scmp.le.s32.totalorder 1, %s16
      %p227 = scmp.lt.s32.totalorder %s16, 9
      %p228 = pnand %p226, %p227
      %p229 = pneg %p228
      // Predicated region
      $region33: #{tpu_custom_call.1} parent=5 // pred_check
        _
      $region34: #{tpu_custom_call.1} parent=5 // pred_check_branch
        %231 = sbr.rel (%p228) target = $region36
      $region35: #{tpu_custom_call.1} parent=5 // pred_region
        %s232 = ssub.s32 %s16, 1
        %s233 = sand.u32 %s43, 1
        %s234 = scalar_lea.sflag [#allocation4], %s233
        %s235 = sand.u32 %s43, 1
        %s236 = smul.addr %s235, 16
        %s237 = scalar_lea.vmem [#allocation3], %s236
        // Predicated region
        $region37: #{tpu_custom_call.1} parent=35 // pred_check
          %p238 = pneg %p56
        $region38: #{tpu_custom_call.1} parent=35 // pred_check_branch
          %240 = sbr.rel (%p238) target = $region40
        $region39: #{tpu_custom_call.1} parent=35 // pred_region
          %242 = dma.done %s234, 256
        $region40: #{tpu_custom_call.1} parent=35 // pred_fallthru
          _
        %s243 = sand.u32 %s73, 1
        %s244 = scalar_lea.sflag [#allocation6], %s243
        %s245 = sand.u32 %s73, 1
        %s246 = smul.addr %s245, 16
        %s247 = scalar_lea.vmem [#allocation5], %s246
        // Predicated region
        $region41: #{tpu_custom_call.1} parent=35 // pred_check
          %p248 = pneg %p86
        $region42: #{tpu_custom_call.1} parent=35 // pred_check_branch
          %250 = sbr.rel (%p248) target = $region44
        $region43: #{tpu_custom_call.1} parent=35 // pred_region
          %252 = dma.done %s244, 256
        $region44: #{tpu_custom_call.1} parent=35 // pred_fallthru
          _
        %s253 = sand.u32 %s43, 1
        %s254 = scalar_lea.sflag [#allocation4], %s253
        %s255 = sand.u32 %s43, 1
        %s256 = smul.addr %s255, 16
        %s257 = scalar_lea.vmem [#allocation3], %s256
        %p258 = pneg %p56
        %p259 = pneg %p53
        %s260 = sand.u32 %s73, 1
        %s261 = scalar_lea.sflag [#allocation6], %s260
        %s262 = sand.u32 %s73, 1
        %s263 = smul.addr %s262, 16
        %s264 = scalar_lea.vmem [#allocation5], %s263
        %p265 = pneg %p86
        %p266 = pneg %p83
        %p267 = pneg %p107
        %p268 = pneg %p104
        %p269 = pneg %p128
        %p270 = pneg %p125
        %p271 = pneg %p156
        %p272 = pneg %p153
        %s273 = smul.u32 8, %s26
        %p274 = scmp.lt.s32.totalorder %s25, 1
        %s275 = scalar_select %p274, %s25, 1
        %p276 = scmp.lt.s32.totalorder %s273, 31
        %s277 = scalar_select %p276, %s273, 31
        %s278 = smul.addr %s275, 32
        %s279 = sadd.s32 %s277, %s278
        %s280 = smul.addr %s279, 8
        %s281 = scalar_lea.vmem %s4, %s280
        %s282 = smul.u32 8, %s26
        %s283 = sadd.s32 %s26, 1
        %s284 = smul.u32 8, %s283
        %s285 = smul.u32 8, %s26
        %p286 = scmp.lt.s32.totalorder %s25, 1
        %s287 = scalar_select %p286, %s25, 1
        %p288 = scmp.lt.s32.totalorder %s285, 31
        %s289 = scalar_select %p288, %s285, 31
        %s290 = smul.addr %s287, 32
        %s291 = sadd.s32 %s289, %s290
        %s292 = smul.addr %s291, 8
        %s293 = scalar_lea.vmem %s4, %s292
        %s294 = smul.u32 8, %s26
        %v296 = vld [vmem:[%s237] sm:$0xff]
        %v297 = vld [vmem:[%s237 + $0x8] sm:$0xff]
        %v298 = vld [vmem:[%s247] sm:$0xff]
        %v299 = vld [vmem:[%s247 + $0x8] sm:$0xff]
        %302 = vst [vmem:[#allocation1] ss:$4 sm:$0xff] %v296
        %s303 = scalar_lea.vmem [#allocation1], 32
        %304 = vst [vmem:[%s303] ss:$4 sm:$0xff] %v297
        %v305 = vld.sshfl [vmem:[#allocation1] sm:$0xff pattern:$0x73625140]
        %v306 = vld.sshfl [vmem:[#allocation1 + $0x8] sm:$0xff pattern:$0x73625140]
        %v307 = vld.sshfl [vmem:[#allocation1 + $0x10] sm:$0xff pattern:$0x73625140]
        %v308 = vld.sshfl [vmem:[#allocation1 + $0x18] sm:$0xff pattern:$0x73625140]
        %v309 = vld.sshfl [vmem:[#allocation1 + $0x20] sm:$0xff pattern:$0x73625140]
        %v310 = vld.sshfl [vmem:[#allocation1 + $0x28] sm:$0xff pattern:$0x73625140]
        %v311 = vld.sshfl [vmem:[#allocation1 + $0x30] sm:$0xff pattern:$0x73625140]
        %v312 = vld.sshfl [vmem:[#allocation1 + $0x38] sm:$0xff pattern:$0x73625140]
        %323 = vst [vmem:[#allocation1] ss:$4 sm:$0xff] %v298
        %s324 = scalar_lea.vmem [#allocation1], 32
        %325 = vst [vmem:[%s324] ss:$4 sm:$0xff] %v299
        %v326 = vld.sshfl [vmem:[#allocation1] sm:$0xff pattern:$0x73625140]
        %v327 = vld.sshfl [vmem:[#allocation1 + $0x8] sm:$0xff pattern:$0x73625140]
        %v328 = vld.sshfl [vmem:[#allocation1 + $0x10] sm:$0xff pattern:$0x73625140]
        %v329 = vld.sshfl [vmem:[#allocation1 + $0x18] sm:$0xff pattern:$0x73625140]
        %v330 = vld.sshfl [vmem:[#allocation1 + $0x20] sm:$0xff pattern:$0x73625140]
        %v331 = vld.sshfl [vmem:[#allocation1 + $0x28] sm:$0xff pattern:$0x73625140]
        %v338 = vpack.c.bf16 %v306, %v305
        %v339 = vpack.c.bf16 %v308, %v307
        %v340 = vpack.c.bf16 %v310, %v309
        %v341 = vpack.c.bf16 %v312, %v311
        %v342 = vpack.c.bf16 %v327, %v326
        %v343 = vpack.c.bf16 %v329, %v328
        %v344 = vpack.c.bf16 %v331, %v330
        %345 = vst [vmem:[#allocation2] sm:$0x11] %v338
        %346 = vst [vmem:[#allocation2 + $0x8] sm:$0x11] %v339
        %347 = vst [vmem:[#allocation2 + $0x10] sm:$0x11] %v340
        %348 = vst [vmem:[#allocation2 + $0x18] sm:$0x11] %v341
        %v354 = vrot.slane %v338, 7
        %v355 = vrot.slane %v339, 7
        %v356 = vrot.slane %v340, 7
        %v357 = vrot.slane %v341, 7
        %v358 = vrot.slane %v342, 7
        %359 = vrot.lane.b32.xlu0 %v354, 127
        %v360 = vpop.permute.xlu0 %359
        %361 = vrot.lane.b32.xlu0 %v355, 127
        %v362 = vpop.permute.xlu0 %361
        %363 = vrot.lane.b32.xlu0 %v356, 127
        %v364 = vpop.permute.xlu0 %363
        %365 = vrot.lane.b32.xlu0 %v357, 127
        %v366 = vpop.permute.xlu0 %365
        %367 = vrot.lane.b32.xlu0 %v358, 127
        %v368 = vpop.permute.xlu0 %367
        %v369 = vrot.slane %v360, 4
        %v370 = vrot.slane %v362, 4
        %v371 = vrot.slane %v364, 4
        %v372 = vrot.slane %v366, 4
        %v373 = vrot.slane %v368, 4
        %vm374 = vcmask 1043456
        %v375 = vsel %vm374, %v369, %v370
        %vm376 = vcmask 1039360
        %v377 = vsel %vm376, %v360, %v375
        %v378 = vsel %vm374, %v370, %v371
        %v379 = vsel %vm376, %v362, %v378
        %v380 = vsel %vm374, %v371, %v372
        %v381 = vsel %vm376, %v364, %v380
        %v382 = vsel %vm374, %v372, %v373
        %v383 = vsel %vm376, %v366, %v382
        %388 = vst [vmem:[#allocation2] sm:$0x22] %v377
        %389 = vst [vmem:[#allocation2 + $0x8] sm:$0x22] %v379
        %390 = vst [vmem:[#allocation2 + $0x10] sm:$0x22] %v381
        %391 = vst [vmem:[#allocation2 + $0x18] sm:$0x22] %v383
        %v392 = vrot.slane %v338, 6
        %v393 = vrot.slane %v339, 6
        %v394 = vrot.slane %v340, 6
        %v395 = vrot.slane %v341, 6
        %v396 = vrot.slane %v342, 6
        %397 = vrot.lane.b32.xlu0 %v392, 126
        %v398 = vpop.permute.xlu0 %397
        %399 = vrot.lane.b32.xlu0 %v393, 126
        %v400 = vpop.permute.xlu0 %399
        %401 = vrot.lane.b32.xlu0 %v394, 126
        %v402 = vpop.permute.xlu0 %401
        %403 = vrot.lane.b32.xlu0 %v395, 126
        %v404 = vpop.permute.xlu0 %403
        %405 = vrot.lane.b32.xlu0 %v396, 126
        %v406 = vpop.permute.xlu0 %405
        %v407 = vrot.slane %v398, 4
        %v408 = vrot.slane %v400, 4
        %v409 = vrot.slane %v402, 4
        %v410 = vrot.slane %v404, 4
        %v411 = vrot.slane %v406, 4
        %v412 = vsel %vm374, %v407, %v408
        %vm413 = vcmask 1031168
        %v414 = vsel %vm413, %v398, %v412
        %v415 = vsel %vm374, %v408, %v409
        %v416 = vsel %vm413, %v400, %v415
        %v417 = vsel %vm374, %v409, %v410
        %v418 = vsel %vm413, %v402, %v417
        %v419 = vsel %vm374, %v410, %v411
        %v420 = vsel %vm413, %v404, %v419
        %425 = vst [vmem:[#allocation2] sm:$0x44] %v414
        %426 = vst [vmem:[#allocation2 + $0x8] sm:$0x44] %v416
        %427 = vst [vmem:[#allocation2 + $0x10] sm:$0x44] %v418
        %428 = vst [vmem:[#allocation2 + $0x18] sm:$0x44] %v420
        %v429 = vrot.slane %v338, 5
        %v430 = vrot.slane %v339, 5
        %v431 = vrot.slane %v340, 5
        %v432 = vrot.slane %v341, 5
        %v433 = vrot.slane %v342, 5
        %434 = vrot.lane.b32.xlu0 %v429, 112
        %v435 = vpop.permute.xlu0 %434
        %436 = vrot.lane.b32.xlu0 %v430, 112
        %v437 = vpop.permute.xlu0 %436
        %438 = vrot.lane.b32.xlu0 %v431, 112
        %v439 = vpop.permute.xlu0 %438
        %440 = vrot.lane.b32.xlu0 %v432, 112
        %v441 = vpop.permute.xlu0 %440
        %442 = vrot.lane.b32.xlu0 %v433, 112
        %v443 = vpop.permute.xlu0 %442
        %v444 = vrot.slane %v435, 4
        %v445 = vrot.slane %v437, 4
        %v446 = vrot.slane %v439, 4
        %v447 = vrot.slane %v441, 4
        %v448 = vrot.slane %v443, 4
        %v449 = vsel %vm374, %v444, %v445
        %vm450 = vcmask 916480
        %v451 = vsel %vm450, %v435, %v449
        %v452 = vsel %vm374, %v445, %v446
        %v453 = vsel %vm450, %v437, %v452
        %v454 = vsel %vm374, %v446, %v447
        %v455 = vsel %vm450, %v439, %v454
        %v456 = vsel %vm374, %v447, %v448
        %v457 = vsel %vm450, %v441, %v456
        %462 = vst [vmem:[#allocation2] sm:$0x88] %v451
        %463 = vst [vmem:[#allocation2 + $0x8] sm:$0x88] %v453
        %464 = vst [vmem:[#allocation2 + $0x10] sm:$0x88] %v455
        %465 = vst [vmem:[#allocation2 + $0x18] sm:$0x88] %v457
        %466 = vrot.lane.b32.xlu0 %v338, 111
        %v467 = vpop.permute.xlu0 %466
        %468 = vrot.lane.b32.xlu0 %v339, 111
        %v469 = vpop.permute.xlu0 %468
        %470 = vrot.lane.b32.xlu0 %v340, 111
        %v471 = vpop.permute.xlu0 %470
        %472 = vrot.lane.b32.xlu0 %v341, 111
        %v473 = vpop.permute.xlu0 %472
        %474 = vrot.lane.b32.xlu0 %v342, 111
        %v475 = vpop.permute.xlu0 %474
        %v476 = vrot.slane %v467, 4
        %v477 = vrot.slane %v469, 4
        %v478 = vrot.slane %v471, 4
        %v479 = vrot.slane %v473, 4
        %v480 = vrot.slane %v475, 4
        %v481 = vsel %vm374, %v476, %v477
        %vm482 = vcmask 908288
        %v483 = vsel %vm482, %v467, %v481
        %v484 = vsel %vm374, %v477, %v478
        %v485 = vsel %vm482, %v469, %v484
        %v486 = vsel %vm374, %v478, %v479
        %v487 = vsel %vm482, %v471, %v486
        %v488 = vsel %vm374, %v479, %v480
        %v489 = vsel %vm482, %v473, %v488
        %494 = vst [vmem:[#allocation2 + $0x20] sm:$0x11] %v483
        %495 = vst [vmem:[#allocation2 + $0x28] sm:$0x11] %v485
        %496 = vst [vmem:[#allocation2 + $0x30] sm:$0x11] %v487
        %497 = vst [vmem:[#allocation2 + $0x38] sm:$0x11] %v489
        %498 = vrot.lane.b32.xlu0 %v354, 110
        %v499 = vpop.permute.xlu0 %498
        %500 = vrot.lane.b32.xlu0 %v355, 110
        %v501 = vpop.permute.xlu0 %500
        %502 = vrot.lane.b32.xlu0 %v356, 110
        %v503 = vpop.permute.xlu0 %502
        %504 = vrot.lane.b32.xlu0 %v357, 110
        %v505 = vpop.permute.xlu0 %504
        %506 = vrot.lane.b32.xlu0 %v358, 110
        %v507 = vpop.permute.xlu0 %506
        %v508 = vrot.slane %v499, 4
        %v509 = vrot.slane %v501, 4
        %v510 = vrot.slane %v503, 4
        %v511 = vrot.slane %v505, 4
        %v512 = vrot.slane %v507, 4
        %v513 = vsel %vm374, %v508, %v509
        %vm514 = vcmask 900096
        %v515 = vsel %vm514, %v499, %v513
        %v516 = vsel %vm374, %v509, %v510
        %v517 = vsel %vm514, %v501, %v516
        %v518 = vsel %vm374, %v510, %v511
        %v519 = vsel %vm514, %v503, %v518
        %v520 = vsel %vm374, %v511, %v512
        %v521 = vsel %vm514, %v505, %v520
        %526 = vst [vmem:[#allocation2 + $0x20] sm:$0x22] %v515
        %527 = vst [vmem:[#allocation2 + $0x28] sm:$0x22] %v517
        %528 = vst [vmem:[#allocation2 + $0x30] sm:$0x22] %v519
        %529 = vst [vmem:[#allocation2 + $0x38] sm:$0x22] %v521
        %530 = vrot.lane.b32.xlu0 %v392, 96
        %v531 = vpop.permute.xlu0 %530
        %532 = vrot.lane.b32.xlu0 %v393, 96
        %v533 = vpop.permute.xlu0 %532
        %534 = vrot.lane.b32.xlu0 %v394, 96
        %v535 = vpop.permute.xlu0 %534
        %536 = vrot.lane.b32.xlu0 %v395, 96
        %v537 = vpop.permute.xlu0 %536
        %538 = vrot.lane.b32.xlu0 %v396, 96
        %v539 = vpop.permute.xlu0 %538
        %v540 = vrot.slane %v531, 4
        %v541 = vrot.slane %v533, 4
        %v542 = vrot.slane %v535, 4
        %v543 = vrot.slane %v537, 4
        %v544 = vrot.slane %v539, 4
        %v545 = vsel %vm374, %v540, %v541
        %vm546 = vcmask 785408
        %v547 = vsel %vm546, %v531, %v545
        %v548 = vsel %vm374, %v541, %v542
        %v549 = vsel %vm546, %v533, %v548
        %v550 = vsel %vm374, %v542, %v543
        %v551 = vsel %vm546, %v535, %v550
        %v552 = vsel %vm374, %v543, %v544
        %v553 = vsel %vm546, %v537, %v552
        %558 = vst [vmem:[#allocation2 + $0x20] sm:$0x44] %v547
        %559 = vst [vmem:[#allocation2 + $0x28] sm:$0x44] %v549
        %560 = vst [vmem:[#allocation2 + $0x30] sm:$0x44] %v551
        %561 = vst [vmem:[#allocation2 + $0x38] sm:$0x44] %v553
        %562 = vrot.lane.b32.xlu0 %v429, 95
        %v563 = vpop.permute.xlu0 %562
        %564 = vrot.lane.b32.xlu0 %v430, 95
        %v565 = vpop.permute.xlu0 %564
        %566 = vrot.lane.b32.xlu0 %v431, 95
        %v567 = vpop.permute.xlu0 %566
        %568 = vrot.lane.b32.xlu0 %v432, 95
        %v569 = vpop.permute.xlu0 %568
        %570 = vrot.lane.b32.xlu0 %v433, 95
        %v571 = vpop.permute.xlu0 %570
        %v572 = vrot.slane %v563, 4
        %v573 = vrot.slane %v565, 4
        %v574 = vrot.slane %v567, 4
        %v575 = vrot.slane %v569, 4
        %v576 = vrot.slane %v571, 4
        %v577 = vsel %vm374, %v572, %v573
        %vm578 = vcmask 777216
        %v579 = vsel %vm578, %v563, %v577
        %v580 = vsel %vm374, %v573, %v574
        %v581 = vsel %vm578, %v565, %v580
        %v582 = vsel %vm374, %v574, %v575
        %v583 = vsel %vm578, %v567, %v582
        %v584 = vsel %vm374, %v575, %v576
        %v585 = vsel %vm578, %v569, %v584
        %590 = vst [vmem:[#allocation2 + $0x20] sm:$0x88] %v579
        %591 = vst [vmem:[#allocation2 + $0x28] sm:$0x88] %v581
        %592 = vst [vmem:[#allocation2 + $0x30] sm:$0x88] %v583
        %593 = vst [vmem:[#allocation2 + $0x38] sm:$0x88] %v585
        %594 = vrot.lane.b32.xlu0 %v338, 94
        %v595 = vpop.permute.xlu0 %594
        %596 = vrot.lane.b32.xlu0 %v339, 94
        %v597 = vpop.permute.xlu0 %596
        %598 = vrot.lane.b32.xlu0 %v340, 94
        %v599 = vpop.permute.xlu0 %598
        %600 = vrot.lane.b32.xlu0 %v341, 94
        %v601 = vpop.permute.xlu0 %600
        %602 = vrot.lane.b32.xlu0 %v342, 94
        %v603 = vpop.permute.xlu0 %602
        %v604 = vrot.slane %v595, 4
        %v605 = vrot.slane %v597, 4
        %v606 = vrot.slane %v599, 4
        %v607 = vrot.slane %v601, 4
        %v608 = vrot.slane %v603, 4
        %v609 = vsel %vm374, %v604, %v605
        %vm610 = vcmask 769024
        %v611 = vsel %vm610, %v595, %v609
        %v612 = vsel %vm374, %v605, %v606
        %v613 = vsel %vm610, %v597, %v612
        %v614 = vsel %vm374, %v606, %v607
        %v615 = vsel %vm610, %v599, %v614
        %v616 = vsel %vm374, %v607, %v608
        %v617 = vsel %vm610, %v601, %v616
        %622 = vst [vmem:[#allocation2 + $0x40] sm:$0x11] %v611
        %623 = vst [vmem:[#allocation2 + $0x48] sm:$0x11] %v613
        %624 = vst [vmem:[#allocation2 + $0x50] sm:$0x11] %v615
        %625 = vst [vmem:[#allocation2 + $0x58] sm:$0x11] %v617
        %630 = vst [vmem:[#allocation2 + $0x40] sm:$0x22] %v355
        %631 = vst [vmem:[#allocation2 + $0x48] sm:$0x22] %v356
        %632 = vst [vmem:[#allocation2 + $0x50] sm:$0x22] %v357
        %633 = vst [vmem:[#allocation2 + $0x58] sm:$0x22] %v358
        %v635 = vrot.slane %v343, 6
        %636 = vrot.lane.b32.xlu0 %v393, 127
        %v637 = vpop.permute.xlu0 %636
        %638 = vrot.lane.b32.xlu0 %v394, 127
        %v639 = vpop.permute.xlu0 %638
        %640 = vrot.lane.b32.xlu0 %v395, 127
        %v641 = vpop.permute.xlu0 %640
        %642 = vrot.lane.b32.xlu0 %v396, 127
        %v643 = vpop.permute.xlu0 %642
        %644 = vrot.lane.b32.xlu0 %v635, 127
        %v645 = vpop.permute.xlu0 %644
        %v646 = vrot.slane %v637, 4
        %v647 = vrot.slane %v639, 4
        %v648 = vrot.slane %v641, 4
        %v649 = vrot.slane %v643, 4
        %v650 = vrot.slane %v645, 4
        %v651 = vsel %vm374, %v646, %v647
        %v652 = vsel %vm376, %v637, %v651
        %v653 = vsel %vm374, %v647, %v648
        %v654 = vsel %vm376, %v639, %v653
        %v655 = vsel %vm374, %v648, %v649
        %v656 = vsel %vm376, %v641, %v655
        %v657 = vsel %vm374, %v649, %v650
        %v658 = vsel %vm376, %v643, %v657
        %663 = vst [vmem:[#allocation2 + $0x40] sm:$0x44] %v652
        %664 = vst [vmem:[#allocation2 + $0x48] sm:$0x44] %v654
        %665 = vst [vmem:[#allocation2 + $0x50] sm:$0x44] %v656
        %666 = vst [vmem:[#allocation2 + $0x58] sm:$0x44] %v658
        %v667 = vrot.slane %v343, 5
        %668 = vrot.lane.b32.xlu0 %v430, 126
        %v669 = vpop.permute.xlu0 %668
        %670 = vrot.lane.b32.xlu0 %v431, 126
        %v671 = vpop.permute.xlu0 %670
        %672 = vrot.lane.b32.xlu0 %v432, 126
        %v673 = vpop.permute.xlu0 %672
        %674 = vrot.lane.b32.xlu0 %v433, 126
        %v675 = vpop.permute.xlu0 %674
        %676 = vrot.lane.b32.xlu0 %v667, 126
        %v677 = vpop.permute.xlu0 %676
        %v678 = vrot.slane %v669, 4
        %v679 = vrot.slane %v671, 4
        %v680 = vrot.slane %v673, 4
        %v681 = vrot.slane %v675, 4
        %v682 = vrot.slane %v677, 4
        %v683 = vsel %vm374, %v678, %v679
        %v684 = vsel %vm413, %v669, %v683
        %v685 = vsel %vm374, %v679, %v680
        %v686 = vsel %vm413, %v671, %v685
        %v687 = vsel %vm374, %v680, %v681
        %v688 = vsel %vm413, %v673, %v687
        %v689 = vsel %vm374, %v681, %v682
        %v690 = vsel %vm413, %v675, %v689
        %695 = vst [vmem:[#allocation2 + $0x40] sm:$0x88] %v684
        %696 = vst [vmem:[#allocation2 + $0x48] sm:$0x88] %v686
        %697 = vst [vmem:[#allocation2 + $0x50] sm:$0x88] %v688
        %698 = vst [vmem:[#allocation2 + $0x58] sm:$0x88] %v690
        %699 = vrot.lane.b32.xlu0 %v339, 112
        %v700 = vpop.permute.xlu0 %699
        %701 = vrot.lane.b32.xlu0 %v340, 112
        %v702 = vpop.permute.xlu0 %701
        %703 = vrot.lane.b32.xlu0 %v341, 112
        %v704 = vpop.permute.xlu0 %703
        %705 = vrot.lane.b32.xlu0 %v342, 112
        %v706 = vpop.permute.xlu0 %705
        %707 = vrot.lane.b32.xlu0 %v343, 112
        %v708 = vpop.permute.xlu0 %707
        %v709 = vrot.slane %v700, 4
        %v710 = vrot.slane %v702, 4
        %v711 = vrot.slane %v704, 4
        %v712 = vrot.slane %v706, 4
        %v713 = vrot.slane %v708, 4
        %v714 = vsel %vm374, %v709, %v710
        %v715 = vsel %vm450, %v700, %v714
        %v716 = vsel %vm374, %v710, %v711
        %v717 = vsel %vm450, %v702, %v716
        %v718 = vsel %vm374, %v711, %v712
        %v719 = vsel %vm450, %v704, %v718
        %v720 = vsel %vm374, %v712, %v713
        %v721 = vsel %vm450, %v706, %v720
        %726 = vst [vmem:[#allocation2 + $0x60] sm:$0x11] %v715
        %727 = vst [vmem:[#allocation2 + $0x68] sm:$0x11] %v717
        %728 = vst [vmem:[#allocation2 + $0x70] sm:$0x11] %v719
        %729 = vst [vmem:[#allocation2 + $0x78] sm:$0x11] %v721
        %v730 = vrot.slane %v343, 7
        %731 = vrot.lane.b32.xlu0 %v355, 111
        %v732 = vpop.permute.xlu0 %731
        %733 = vrot.lane.b32.xlu0 %v356, 111
        %v734 = vpop.permute.xlu0 %733
        %735 = vrot.lane.b32.xlu0 %v357, 111
        %v736 = vpop.permute.xlu0 %735
        %737 = vrot.lane.b32.xlu0 %v358, 111
        %v738 = vpop.permute.xlu0 %737
        %739 = vrot.lane.b32.xlu0 %v730, 111
        %v740 = vpop.permute.xlu0 %739
        %v741 = vrot.slane %v732, 4
        %v742 = vrot.slane %v734, 4
        %v743 = vrot.slane %v736, 4
        %v744 = vrot.slane %v738, 4
        %v745 = vrot.slane %v740, 4
        %v746 = vsel %vm374, %v741, %v742
        %v747 = vsel %vm482, %v732, %v746
        %v748 = vsel %vm374, %v742, %v743
        %v749 = vsel %vm482, %v734, %v748
        %v750 = vsel %vm374, %v743, %v744
        %v751 = vsel %vm482, %v736, %v750
        %v752 = vsel %vm374, %v744, %v745
        %v753 = vsel %vm482, %v738, %v752
        %758 = vst [vmem:[#allocation2 + $0x60] sm:$0x22] %v747
        %759 = vst [vmem:[#allocation2 + $0x68] sm:$0x22] %v749
        %760 = vst [vmem:[#allocation2 + $0x70] sm:$0x22] %v751
        %761 = vst [vmem:[#allocation2 + $0x78] sm:$0x22] %v753
        %762 = vrot.lane.b32.xlu0 %v393, 110
        %v763 = vpop.permute.xlu0 %762
        %764 = vrot.lane.b32.xlu0 %v394, 110
        %v765 = vpop.permute.xlu0 %764
        %766 = vrot.lane.b32.xlu0 %v395, 110
        %v767 = vpop.permute.xlu0 %766
        %768 = vrot.lane.b32.xlu0 %v396, 110
        %v769 = vpop.permute.xlu0 %768
        %770 = vrot.lane.b32.xlu0 %v635, 110
        %v771 = vpop.permute.xlu0 %770
        %v772 = vrot.slane %v763, 4
        %v773 = vrot.slane %v765, 4
        %v774 = vrot.slane %v767, 4
        %v775 = vrot.slane %v769, 4
        %v776 = vrot.slane %v771, 4
        %v777 = vsel %vm374, %v772, %v773
        %v778 = vsel %vm514, %v763, %v777
        %v779 = vsel %vm374, %v773, %v774
        %v780 = vsel %vm514, %v765, %v779
        %v781 = vsel %vm374, %v774, %v775
        %v782 = vsel %vm514, %v767, %v781
        %v783 = vsel %vm374, %v775, %v776
        %v784 = vsel %vm514, %v769, %v783
        %789 = vst [vmem:[#allocation2 + $0x60] sm:$0x44] %v778
        %790 = vst [vmem:[#allocation2 + $0x68] sm:$0x44] %v780
        %791 = vst [vmem:[#allocation2 + $0x70] sm:$0x44] %v782
        %792 = vst [vmem:[#allocation2 + $0x78] sm:$0x44] %v784
        %793 = vrot.lane.b32.xlu0 %v430, 96
        %v794 = vpop.permute.xlu0 %793
        %795 = vrot.lane.b32.xlu0 %v431, 96
        %v796 = vpop.permute.xlu0 %795
        %797 = vrot.lane.b32.xlu0 %v432, 96
        %v798 = vpop.permute.xlu0 %797
        %799 = vrot.lane.b32.xlu0 %v433, 96
        %v800 = vpop.permute.xlu0 %799
        %801 = vrot.lane.b32.xlu0 %v667, 96
        %v802 = vpop.permute.xlu0 %801
        %v803 = vrot.slane %v794, 4
        %v804 = vrot.slane %v796, 4
        %v805 = vrot.slane %v798, 4
        %v806 = vrot.slane %v800, 4
        %v807 = vrot.slane %v802, 4
        %v808 = vsel %vm374, %v803, %v804
        %v809 = vsel %vm546, %v794, %v808
        %v810 = vsel %vm374, %v804, %v805
        %v811 = vsel %vm546, %v796, %v810
        %v812 = vsel %vm374, %v805, %v806
        %v813 = vsel %vm546, %v798, %v812
        %v814 = vsel %vm374, %v806, %v807
        %v815 = vsel %vm546, %v800, %v814
        %820 = vst [vmem:[#allocation2 + $0x60] sm:$0x88] %v809
        %821 = vst [vmem:[#allocation2 + $0x68] sm:$0x88] %v811
        %822 = vst [vmem:[#allocation2 + $0x70] sm:$0x88] %v813
        %823 = vst [vmem:[#allocation2 + $0x78] sm:$0x88] %v815
        %824 = vrot.lane.b32.xlu0 %v339, 95
        %v825 = vpop.permute.xlu0 %824
        %826 = vrot.lane.b32.xlu0 %v340, 95
        %v827 = vpop.permute.xlu0 %826
        %828 = vrot.lane.b32.xlu0 %v341, 95
        %v829 = vpop.permute.xlu0 %828
        %830 = vrot.lane.b32.xlu0 %v342, 95
        %v831 = vpop.permute.xlu0 %830
        %832 = vrot.lane.b32.xlu0 %v343, 95
        %v833 = vpop.permute.xlu0 %832
        %v834 = vrot.slane %v825, 4
        %v835 = vrot.slane %v827, 4
        %v836 = vrot.slane %v829, 4
        %v837 = vrot.slane %v831, 4
        %v838 = vrot.slane %v833, 4
        %v839 = vsel %vm374, %v834, %v835
        %v840 = vsel %vm578, %v825, %v839
        %v841 = vsel %vm374, %v835, %v836
        %v842 = vsel %vm578, %v827, %v841
        %v843 = vsel %vm374, %v836, %v837
        %v844 = vsel %vm578, %v829, %v843
        %v845 = vsel %vm374, %v837, %v838
        %v846 = vsel %vm578, %v831, %v845
        %851 = vst [vmem:[#allocation2 + $0x80] sm:$0x11] %v840
        %852 = vst [vmem:[#allocation2 + $0x88] sm:$0x11] %v842
        %853 = vst [vmem:[#allocation2 + $0x90] sm:$0x11] %v844
        %854 = vst [vmem:[#allocation2 + $0x98] sm:$0x11] %v846
        %855 = vrot.lane.b32.xlu0 %v355, 94
        %v856 = vpop.permute.xlu0 %855
        %857 = vrot.lane.b32.xlu0 %v356, 94
        %v858 = vpop.permute.xlu0 %857
        %859 = vrot.lane.b32.xlu0 %v357, 94
        %v860 = vpop.permute.xlu0 %859
        %861 = vrot.lane.b32.xlu0 %v358, 94
        %v862 = vpop.permute.xlu0 %861
        %863 = vrot.lane.b32.xlu0 %v730, 94
        %v864 = vpop.permute.xlu0 %863
        %v865 = vrot.slane %v856, 4
        %v866 = vrot.slane %v858, 4
        %v867 = vrot.slane %v860, 4
        %v868 = vrot.slane %v862, 4
        %v869 = vrot.slane %v864, 4
        %v870 = vsel %vm374, %v865, %v866
        %v871 = vsel %vm610, %v856, %v870
        %v872 = vsel %vm374, %v866, %v867
        %v873 = vsel %vm610, %v858, %v872
        %v874 = vsel %vm374, %v867, %v868
        %v875 = vsel %vm610, %v860, %v874
        %v876 = vsel %vm374, %v868, %v869
        %v877 = vsel %vm610, %v862, %v876
        %882 = vst [vmem:[#allocation2 + $0x80] sm:$0x22] %v871
        %883 = vst [vmem:[#allocation2 + $0x88] sm:$0x22] %v873
        %884 = vst [vmem:[#allocation2 + $0x90] sm:$0x22] %v875
        %885 = vst [vmem:[#allocation2 + $0x98] sm:$0x22] %v877
        %890 = vst [vmem:[#allocation2 + $0x80] sm:$0x44] %v394
        %891 = vst [vmem:[#allocation2 + $0x88] sm:$0x44] %v395
        %892 = vst [vmem:[#allocation2 + $0x90] sm:$0x44] %v396
        %893 = vst [vmem:[#allocation2 + $0x98] sm:$0x44] %v635
        %v895 = vrot.slane %v344, 5
        %896 = vrot.lane.b32.xlu0 %v431, 127
        %v897 = vpop.permute.xlu0 %896
        %898 = vrot.lane.b32.xlu0 %v432, 127
        %v899 = vpop.permute.xlu0 %898
        %900 = vrot.lane.b32.xlu0 %v433, 127
        %v901 = vpop.permute.xlu0 %900
        %902 = vrot.lane.b32.xlu0 %v667, 127
        %v903 = vpop.permute.xlu0 %902
        %904 = vrot.lane.b32.xlu0 %v895, 127
        %v905 = vpop.permute.xlu0 %904
        %v906 = vrot.slane %v897, 4
        %v907 = vrot.slane %v899, 4
        %v908 = vrot.slane %v901, 4
        %v909 = vrot.slane %v903, 4
        %v910 = vrot.slane %v905, 4
        %v911 = vsel %vm374, %v906, %v907
        %v912 = vsel %vm376, %v897, %v911
        %v913 = vsel %vm374, %v907, %v908
        %v914 = vsel %vm376, %v899, %v913
        %v915 = vsel %vm374, %v908, %v909
        %v916 = vsel %vm376, %v901, %v915
        %v917 = vsel %vm374, %v909, %v910
        %v918 = vsel %vm376, %v903, %v917
        %923 = vst [vmem:[#allocation2 + $0x80] sm:$0x88] %v912
        %924 = vst [vmem:[#allocation2 + $0x88] sm:$0x88] %v914
        %925 = vst [vmem:[#allocation2 + $0x90] sm:$0x88] %v916
        %926 = vst [vmem:[#allocation2 + $0x98] sm:$0x88] %v918
        %927 = vrot.lane.b32.xlu0 %v340, 126
        %v928 = vpop.permute.xlu0 %927
        %929 = vrot.lane.b32.xlu0 %v341, 126
        %v930 = vpop.permute.xlu0 %929
        %931 = vrot.lane.b32.xlu0 %v342, 126
        %v932 = vpop.permute.xlu0 %931
        %933 = vrot.lane.b32.xlu0 %v343, 126
        %v934 = vpop.permute.xlu0 %933
        %935 = vrot.lane.b32.xlu0 %v344, 126
        %v936 = vpop.permute.xlu0 %935
        %v937 = vrot.slane %v928, 4
        %v938 = vrot.slane %v930, 4
        %v939 = vrot.slane %v932, 4
        %v940 = vrot.slane %v934, 4
        %v941 = vrot.slane %v936, 4
        %v942 = vsel %vm374, %v937, %v938
        %v943 = vsel %vm413, %v928, %v942
        %v944 = vsel %vm374, %v938, %v939
        %v945 = vsel %vm413, %v930, %v944
        %v946 = vsel %vm374, %v939, %v940
        %v947 = vsel %vm413, %v932, %v946
        %v948 = vsel %vm374, %v940, %v941
        %v949 = vsel %vm413, %v934, %v948
        %954 = vst [vmem:[#allocation2 + $0xa0] sm:$0x11] %v943
        %955 = vst [vmem:[#allocation2 + $0xa8] sm:$0x11] %v945
        %956 = vst [vmem:[#allocation2 + $0xb0] sm:$0x11] %v947
        %957 = vst [vmem:[#allocation2 + $0xb8] sm:$0x11] %v949
        %v958 = vrot.slane %v344, 7
        %959 = vrot.lane.b32.xlu0 %v356, 112
        %v960 = vpop.permute.xlu0 %959
        %961 = vrot.lane.b32.xlu0 %v357, 112
        %v962 = vpop.permute.xlu0 %961
        %963 = vrot.lane.b32.xlu0 %v358, 112
        %v964 = vpop.permute.xlu0 %963
        %965 = vrot.lane.b32.xlu0 %v730, 112
        %v966 = vpop.permute.xlu0 %965
        %967 = vrot.lane.b32.xlu0 %v958, 112
        %v968 = vpop.permute.xlu0 %967
        %v969 = vrot.slane %v960, 4
        %v970 = vrot.slane %v962, 4
        %v971 = vrot.slane %v964, 4
        %v972 = vrot.slane %v966, 4
        %v973 = vrot.slane %v968, 4
        %v974 = vsel %vm374, %v969, %v970
        %v975 = vsel %vm450, %v960, %v974
        %v976 = vsel %vm374, %v970, %v971
        %v977 = vsel %vm450, %v962, %v976
        %v978 = vsel %vm374, %v971, %v972
        %v979 = vsel %vm450, %v964, %v978
        %v980 = vsel %vm374, %v972, %v973
        %v981 = vsel %vm450, %v966, %v980
        %986 = vst [vmem:[#allocation2 + $0xa0] sm:$0x22] %v975
        %987 = vst [vmem:[#allocation2 + $0xa8] sm:$0x22] %v977
        %988 = vst [vmem:[#allocation2 + $0xb0] sm:$0x22] %v979
        %989 = vst [vmem:[#allocation2 + $0xb8] sm:$0x22] %v981
        %v990 = vrot.slane %v344, 6
        %991 = vrot.lane.b32.xlu0 %v394, 111
        %v992 = vpop.permute.xlu0 %991
        %993 = vrot.lane.b32.xlu0 %v395, 111
        %v994 = vpop.permute.xlu0 %993
        %995 = vrot.lane.b32.xlu0 %v396, 111
        %v996 = vpop.permute.xlu0 %995
        %997 = vrot.lane.b32.xlu0 %v635, 111
        %v998 = vpop.permute.xlu0 %997
        %999 = vrot.lane.b32.xlu0 %v990, 111
        %v1000 = vpop.permute.xlu0 %999
        %v1001 = vrot.slane %v992, 4
        %v1002 = vrot.slane %v994, 4
        %v1003 = vrot.slane %v996, 4
        %v1004 = vrot.slane %v998, 4
        %v1005 = vrot.slane %v1000, 4
        %v1006 = vsel %vm374, %v1001, %v1002
        %v1007 = vsel %vm482, %v992, %v1006
        %v1008 = vsel %vm374, %v1002, %v1003
        %v1009 = vsel %vm482, %v994, %v1008
        %v1010 = vsel %vm374, %v1003, %v1004
        %v1011 = vsel %vm482, %v996, %v1010
        %v1012 = vsel %vm374, %v1004, %v1005
        %v1013 = vsel %vm482, %v998, %v1012
        %1018 = vst [vmem:[#allocation2 + $0xa0] sm:$0x44] %v1007
        %1019 = vst [vmem:[#allocation2 + $0xa8] sm:$0x44] %v1009
        %1020 = vst [vmem:[#allocation2 + $0xb0] sm:$0x44] %v1011
        %1021 = vst [vmem:[#allocation2 + $0xb8] sm:$0x44] %v1013
        %1022 = vrot.lane.b32.xlu0 %v431, 110
        %v1023 = vpop.permute.xlu0 %1022
        %1024 = vrot.lane.b32.xlu0 %v432, 110
        %v1025 = vpop.permute.xlu0 %1024
        %1026 = vrot.lane.b32.xlu0 %v433, 110
        %v1027 = vpop.permute.xlu0 %1026
        %1028 = vrot.lane.b32.xlu0 %v667, 110
        %v1029 = vpop.permute.xlu0 %1028
        %1030 = vrot.lane.b32.xlu0 %v895, 110
        %v1031 = vpop.permute.xlu0 %1030
        %v1032 = vrot.slane %v1023, 4
        %v1033 = vrot.slane %v1025, 4
        %v1034 = vrot.slane %v1027, 4
        %v1035 = vrot.slane %v1029, 4
        %v1036 = vrot.slane %v1031, 4
        %v1037 = vsel %vm374, %v1032, %v1033
        %v1038 = vsel %vm514, %v1023, %v1037
        %v1039 = vsel %vm374, %v1033, %v1034
        %v1040 = vsel %vm514, %v1025, %v1039
        %v1041 = vsel %vm374, %v1034, %v1035
        %v1042 = vsel %vm514, %v1027, %v1041
        %v1043 = vsel %vm374, %v1035, %v1036
        %v1044 = vsel %vm514, %v1029, %v1043
        %1049 = vst [vmem:[#allocation2 + $0xa0] sm:$0x88] %v1038
        %1050 = vst [vmem:[#allocation2 + $0xa8] sm:$0x88] %v1040
        %1051 = vst [vmem:[#allocation2 + $0xb0] sm:$0x88] %v1042
        %1052 = vst [vmem:[#allocation2 + $0xb8] sm:$0x88] %v1044
        %1053 = vrot.lane.b32.xlu0 %v340, 96
        %v1054 = vpop.permute.xlu0 %1053
        %1055 = vrot.lane.b32.xlu0 %v341, 96
        %v1056 = vpop.permute.xlu0 %1055
        %1057 = vrot.lane.b32.xlu0 %v342, 96
        %v1058 = vpop.permute.xlu0 %1057
        %1059 = vrot.lane.b32.xlu0 %v343, 96
        %v1060 = vpop.permute.xlu0 %1059
        %1061 = vrot.lane.b32.xlu0 %v344, 96
        %v1062 = vpop.permute.xlu0 %1061
        %v1063 = vrot.slane %v1054, 4
        %v1064 = vrot.slane %v1056, 4
        %v1065 = vrot.slane %v1058, 4
        %v1066 = vrot.slane %v1060, 4
        %v1067 = vrot.slane %v1062, 4
        %v1068 = vsel %vm374, %v1063, %v1064
        %v1069 = vsel %vm546, %v1054, %v1068
        %v1070 = vsel %vm374, %v1064, %v1065
        %v1071 = vsel %vm546, %v1056, %v1070
        %v1072 = vsel %vm374, %v1065, %v1066
        %v1073 = vsel %vm546, %v1058, %v1072
        %v1074 = vsel %vm374, %v1066, %v1067
        %v1075 = vsel %vm546, %v1060, %v1074
        %1080 = vst [vmem:[#allocation2 + $0xc0] sm:$0x11] %v1069
        %1081 = vst [vmem:[#allocation2 + $0xc8] sm:$0x11] %v1071
        %1082 = vst [vmem:[#allocation2 + $0xd0] sm:$0x11] %v1073
        %1083 = vst [vmem:[#allocation2 + $0xd8] sm:$0x11] %v1075
        %1084 = vrot.lane.b32.xlu0 %v356, 95
        %v1085 = vpop.permute.xlu0 %1084
        %1086 = vrot.lane.b32.xlu0 %v357, 95
        %v1087 = vpop.permute.xlu0 %1086
        %1088 = vrot.lane.b32.xlu0 %v358, 95
        %v1089 = vpop.permute.xlu0 %1088
        %1090 = vrot.lane.b32.xlu0 %v730, 95
        %v1091 = vpop.permute.xlu0 %1090
        %1092 = vrot.lane.b32.xlu0 %v958, 95
        %v1093 = vpop.permute.xlu0 %1092
        %v1094 = vrot.slane %v1085, 4
        %v1095 = vrot.slane %v1087, 4
        %v1096 = vrot.slane %v1089, 4
        %v1097 = vrot.slane %v1091, 4
        %v1098 = vrot.slane %v1093, 4
        %v1099 = vsel %vm374, %v1094, %v1095
        %v1100 = vsel %vm578, %v1085, %v1099
        %v1101 = vsel %vm374, %v1095, %v1096
        %v1102 = vsel %vm578, %v1087, %v1101
        %v1103 = vsel %vm374, %v1096, %v1097
        %v1104 = vsel %vm578, %v1089, %v1103
        %v1105 = vsel %vm374, %v1097, %v1098
        %v1106 = vsel %vm578, %v1091, %v1105
        %1111 = vst [vmem:[#allocation2 + $0xc0] sm:$0x22] %v1100
        %1112 = vst [vmem:[#allocation2 + $0xc8] sm:$0x22] %v1102
        %1113 = vst [vmem:[#allocation2 + $0xd0] sm:$0x22] %v1104
        %1114 = vst [vmem:[#allocation2 + $0xd8] sm:$0x22] %v1106
        %1115 = vrot.lane.b32.xlu0 %v394, 94
        %v1116 = vpop.permute.xlu0 %1115
        %1117 = vrot.lane.b32.xlu0 %v395, 94
        %v1118 = vpop.permute.xlu0 %1117
        %1119 = vrot.lane.b32.xlu0 %v396, 94
        %v1120 = vpop.permute.xlu0 %1119
        %1121 = vrot.lane.b32.xlu0 %v635, 94
        %v1122 = vpop.permute.xlu0 %1121
        %1123 = vrot.lane.b32.xlu0 %v990, 94
        %v1124 = vpop.permute.xlu0 %1123
        %v1125 = vrot.slane %v1116, 4
        %v1126 = vrot.slane %v1118, 4
        %v1127 = vrot.slane %v1120, 4
        %v1128 = vrot.slane %v1122, 4
        %v1129 = vrot.slane %v1124, 4
        %v1130 = vsel %vm374, %v1125, %v1126
        %v1131 = vsel %vm610, %v1116, %v1130
        %v1132 = vsel %vm374, %v1126, %v1127
        %v1133 = vsel %vm610, %v1118, %v1132
        %v1134 = vsel %vm374, %v1127, %v1128
        %v1135 = vsel %vm610, %v1120, %v1134
        %v1136 = vsel %vm374, %v1128, %v1129
        %v1137 = vsel %vm610, %v1122, %v1136
        %1142 = vst [vmem:[#allocation2 + $0xc0] sm:$0x44] %v1131
        %1143 = vst [vmem:[#allocation2 + $0xc8] sm:$0x44] %v1133
        %1144 = vst [vmem:[#allocation2 + $0xd0] sm:$0x44] %v1135
        %1145 = vst [vmem:[#allocation2 + $0xd8] sm:$0x44] %v1137
        %v1146 = vld [vmem:[%s2] sm:$0x7]
        %v1147 = vld [vmem:[#allocation2] sm:$0xff]
        %v1148 = vld [vmem:[#allocation2 + $0x8] sm:$0xff]
        %v1149 = vld [vmem:[#allocation2 + $0x10] sm:$0xff]
        %v1150 = vld [vmem:[#allocation2 + $0x18] sm:$0xff]
        %v1151 = vld [vmem:[#allocation2 + $0x20] sm:$0xff]
        %v1152 = vld [vmem:[#allocation2 + $0x28] sm:$0xff]
        %v1153 = vld [vmem:[#allocation2 + $0x30] sm:$0xff]
        %v1154 = vld [vmem:[#allocation2 + $0x38] sm:$0xff]
        %v1155 = vld [vmem:[#allocation2 + $0x40] sm:$0xff]
        %v1156 = vld [vmem:[#allocation2 + $0x48] sm:$0xff]
        %v1157 = vld [vmem:[#allocation2 + $0x50] sm:$0xff]
        %v1158 = vld [vmem:[#allocation2 + $0x58] sm:$0xff]
        %v1159 = vld [vmem:[#allocation2 + $0x60] sm:$0xff]
        %v1160 = vld [vmem:[#allocation2 + $0x68] sm:$0xff]
        %v1161 = vld [vmem:[#allocation2 + $0x70] sm:$0xff]
        %v1162 = vld [vmem:[#allocation2 + $0x78] sm:$0xff]
        %v1163 = vld [vmem:[#allocation2 + $0x80] sm:$0xff]
        %v1164 = vld [vmem:[#allocation2 + $0x88] sm:$0xff]
        %v1165 = vld [vmem:[#allocation2 + $0x90] sm:$0xff]
        %v1166 = vld [vmem:[#allocation2 + $0x98] sm:$0xff]
        %v1167 = vld [vmem:[#allocation2 + $0xa0] sm:$0xff]
        %v1168 = vld [vmem:[#allocation2 + $0xa8] sm:$0xff]
        %v1169 = vld [vmem:[#allocation2 + $0xb0] sm:$0xff]
        %v1170 = vld [vmem:[#allocation2 + $0xb8] sm:$0xff]
        %v1171 = vld [vmem:[#allocation2 + $0xc0] sm:$0x77]
        %v1172 = vld [vmem:[#allocation2 + $0xc8] sm:$0x77]
        %v1173 = vld [vmem:[#allocation2 + $0xd0] sm:$0x77]
        %v1174 = vld [vmem:[#allocation2 + $0xd8] sm:$0x77]
        %v1175 = vld [vmem:[%s3] sm:$0x1f]
        %1177 = vset.pattern.permute.xlu0 0
        %1178 = vperm.xlu0 %1177, %v1175
        %v1179 = vpop.permute.xlu0 %1178
        %v1209 = vunpack.c.l.b16 %v1147
        %v1210 = vunpack.c.h.b16 %v1147
        %v1211 = vunpack.c.l.b16 %v1148
        %v1212 = vunpack.c.h.b16 %v1148
        %v1213 = vunpack.c.l.b16 %v1149
        %v1214 = vunpack.c.h.b16 %v1149
        %v1215 = vunpack.c.l.b16 %v1150
        %v1216 = vunpack.c.h.b16 %v1150
        %v1217 = vunpack.c.l.b16 %v1151
        %v1218 = vunpack.c.h.b16 %v1151
        %v1219 = vunpack.c.l.b16 %v1152
        %v1220 = vunpack.c.h.b16 %v1152
        %v1221 = vunpack.c.l.b16 %v1153
        %v1222 = vunpack.c.h.b16 %v1153
        %v1223 = vunpack.c.l.b16 %v1154
        %v1224 = vunpack.c.h.b16 %v1154
        %v1225 = vunpack.c.l.b16 %v1155
        %v1226 = vunpack.c.h.b16 %v1155
        %v1227 = vunpack.c.l.b16 %v1156
        %v1228 = vunpack.c.h.b16 %v1156
        %v1229 = vunpack.c.l.b16 %v1157
        %v1230 = vunpack.c.h.b16 %v1157
        %v1231 = vunpack.c.l.b16 %v1158
        %v1232 = vunpack.c.h.b16 %v1158
        %v1233 = vunpack.c.l.b16 %v1159
        %v1234 = vunpack.c.h.b16 %v1159
        %v1235 = vunpack.c.l.b16 %v1160
        %v1236 = vunpack.c.h.b16 %v1160
        %v1237 = vunpack.c.l.b16 %v1161
        %v1238 = vunpack.c.h.b16 %v1161
        %v1239 = vunpack.c.l.b16 %v1162
        %v1240 = vunpack.c.h.b16 %v1162
        %v1241 = vunpack.c.l.b16 %v1163
        %v1242 = vunpack.c.h.b16 %v1163
        %v1243 = vunpack.c.l.b16 %v1164
        %v1244 = vunpack.c.h.b16 %v1164
        %v1245 = vunpack.c.l.b16 %v1165
        %v1246 = vunpack.c.h.b16 %v1165
        %v1247 = vunpack.c.l.b16 %v1166
        %v1248 = vunpack.c.h.b16 %v1166
        %v1249 = vunpack.c.l.b16 %v1167
        %v1250 = vunpack.c.h.b16 %v1167
        %v1251 = vunpack.c.l.b16 %v1168
        %v1252 = vunpack.c.h.b16 %v1168
        %v1253 = vunpack.c.l.b16 %v1169
        %v1254 = vunpack.c.h.b16 %v1169
        %v1255 = vunpack.c.l.b16 %v1170
        %v1256 = vunpack.c.h.b16 %v1170
        %v1257 = vunpack.c.l.b16 %v1171
        %v1258 = vunpack.c.h.b16 %v1171
        %v1259 = vunpack.c.l.b16 %v1172
        %v1260 = vunpack.c.h.b16 %v1172
        %v1261 = vunpack.c.l.b16 %v1173
        %v1262 = vunpack.c.h.b16 %v1173
        %v1263 = vunpack.c.l.b16 %v1174
        %v1264 = vunpack.c.h.b16 %v1174
        %v1265 = vpack.c.b16 %v1217, %v1209
        %v1266 = vpack.c.b16 %v1218, %v1210
        %v1267 = vpack.c.b16 %v1219, %v1211
        %v1268 = vpack.c.b16 %v1220, %v1212
        %v1269 = vpack.c.b16 %v1221, %v1213
        %v1270 = vpack.c.b16 %v1222, %v1214
        %v1271 = vpack.c.b16 %v1223, %v1215
        %v1272 = vpack.c.b16 %v1224, %v1216
        %v1273 = vpack.c.b16 %v1233, %v1225
        %v1274 = vpack.c.b16 %v1234, %v1226
        %v1275 = vpack.c.b16 %v1235, %v1227
        %v1276 = vpack.c.b16 %v1236, %v1228
        %v1277 = vpack.c.b16 %v1237, %v1229
        %v1278 = vpack.c.b16 %v1238, %v1230
        %v1279 = vpack.c.b16 %v1239, %v1231
        %v1280 = vpack.c.b16 %v1240, %v1232
        %v1281 = vpack.c.b16 %v1249, %v1241
        %v1282 = vpack.c.b16 %v1250, %v1242
        %v1283 = vpack.c.b16 %v1251, %v1243
        %v1284 = vpack.c.b16 %v1252, %v1244
        %v1285 = vpack.c.b16 %v1253, %v1245
        %v1286 = vpack.c.b16 %v1254, %v1246
        %v1287 = vpack.c.b16 %v1255, %v1247
        %v1288 = vpack.c.b16 %v1256, %v1248
        %v1289 = vpack.c.b16 %v1257, %v1257
        %v1290 = vpack.c.b16 %v1258, %v1258
        %v1291 = vpack.c.b16 %v1259, %v1259
        %v1292 = vpack.c.b16 %v1260, %v1260
        %v1293 = vpack.c.b16 %v1261, %v1261
        %v1294 = vpack.c.b16 %v1262, %v1262
        %v1295 = vpack.c.b16 %v1263, %v1263
        %v1296 = vpack.c.b16 %v1264, %v1264
        %vm1321 = vcmask 441344
        %v1323 = vsel %vm1321, %v1146, 0
        %vm1325 = vcmask 1042432
        %v1327 = vsel %vm1325, %v1289, 0
        %v1330 = vsel %vm1325, %v1290, 0
        %v1333 = vsel %vm1325, %v1291, 0
        %v1336 = vsel %vm1325, %v1292, 0
        %v1339 = vsel %vm1325, %v1293, 0
        %v1342 = vsel %vm1325, %v1294, 0
        %v1345 = vsel %vm1325, %v1295, 0
        %v1348 = vsel %vm1325, %v1296, 0
        %1350 = vmatpush.bf16.msra.mxu0 0
        %1351 = vmatpush.bf16.msra.mxu0 0
        %1352 = vmatpush.bf16.msra.mxu0 0
        %1353 = vmatpush.bf16.msra.mxu0 0
        %1354 = vmatpush.bf16.msra.mxu0 %v1327
        %1355 = vmatpush.bf16.msra.mxu0 %v1281
        %1356 = vmatpush.bf16.msra.mxu0 %v1273
        %1357 = vmatpush.bf16.msra.mxu0 %v1265
        %1358 = vmatmul.bf16.gmra.mxu0 %v1323
        %v1359 = vpop.f32.mrf.mxu0
        %v1360 = vadd.f32 %v1179, %v1359
        %v1361 = vpop.f32.mrf.mxu0
        %1362 = vdwg.mxu0
        %1363 = vmatpush.bf16.msra.mxu0 0
        %1364 = vmatpush.bf16.msra.mxu0 0
        %1365 = vmatpush.bf16.msra.mxu0 0
        %1366 = vmatpush.bf16.msra.mxu0 0
        %1367 = vmatpush.bf16.msra.mxu0 %v1330
        %1368 = vmatpush.bf16.msra.mxu0 %v1282
        %1369 = vmatpush.bf16.msra.mxu0 %v1274
        %1370 = vmatpush.bf16.msra.mxu0 %v1266
        %1371 = vmatmul.bf16.gmra.mxu0 %v1323
        %v1372 = vpop.f32.mrf.mxu0
        %v1373 = vadd.f32 %v1179, %v1372
        %v1374 = vpop.f32.mrf.mxu0
        %1375 = vdwg.mxu0
        %1376 = vmatpush.bf16.msra.mxu0 0
        %1377 = vmatpush.bf16.msra.mxu0 0
        %1378 = vmatpush.bf16.msra.mxu0 0
        %1379 = vmatpush.bf16.msra.mxu0 0
        %1380 = vmatpush.bf16.msra.mxu0 %v1333
        %1381 = vmatpush.bf16.msra.mxu0 %v1283
        %1382 = vmatpush.bf16.msra.mxu0 %v1275
        %1383 = vmatpush.bf16.msra.mxu0 %v1267
        %1384 = vmatmul.bf16.gmra.mxu0 %v1323
        %v1385 = vpop.f32.mrf.mxu0
        %v1386 = vadd.f32 %v1179, %v1385
        %v1387 = vpop.f32.mrf.mxu0
        %1388 = vdwg.mxu0
        %1389 = vmatpush.bf16.msra.mxu0 0
        %1390 = vmatpush.bf16.msra.mxu0 0
        %1391 = vmatpush.bf16.msra.mxu0 0
        %1392 = vmatpush.bf16.msra.mxu0 0
        %1393 = vmatpush.bf16.msra.mxu0 %v1336
        %1394 = vmatpush.bf16.msra.mxu0 %v1284
        %1395 = vmatpush.bf16.msra.mxu0 %v1276
        %1396 = vmatpush.bf16.msra.mxu0 %v1268
        %1397 = vmatmul.bf16.gmra.mxu0 %v1323
        %v1398 = vpop.f32.mrf.mxu0
        %v1399 = vadd.f32 %v1179, %v1398
        %v1400 = vpop.f32.mrf.mxu0
        %1401 = vdwg.mxu0
        %1402 = vmatpush.bf16.msra.mxu0 0
        %1403 = vmatpush.bf16.msra.mxu0 0
        %1404 = vmatpush.bf16.msra.mxu0 0
        %1405 = vmatpush.bf16.msra.mxu0 0
        %1406 = vmatpush.bf16.msra.mxu0 %v1339
        %1407 = vmatpush.bf16.msra.mxu0 %v1285
        %1408 = vmatpush.bf16.msra.mxu0 %v1277
        %1409 = vmatpush.bf16.msra.mxu0 %v1269
        %1410 = vmatmul.bf16.gmra.mxu0 %v1323
        %v1411 = vpop.f32.mrf.mxu0
        %v1412 = vadd.f32 %v1179, %v1411
        %v1413 = vpop.f32.mrf.mxu0
        %1414 = vdwg.mxu0
        %1415 = vmatpush.bf16.msra.mxu0 0
        %1416 = vmatpush.bf16.msra.mxu0 0
        %1417 = vmatpush.bf16.msra.mxu0 0
        %1418 = vmatpush.bf16.msra.mxu0 0
        %1419 = vmatpush.bf16.msra.mxu0 %v1342
        %1420 = vmatpush.bf16.msra.mxu0 %v1286
        %1421 = vmatpush.bf16.msra.mxu0 %v1278
        %1422 = vmatpush.bf16.msra.mxu0 %v1270
        %1423 = vmatmul.bf16.gmra.mxu0 %v1323
        %v1424 = vpop.f32.mrf.mxu0
        %v1425 = vadd.f32 %v1179, %v1424
        %v1426 = vpop.f32.mrf.mxu0
        %1427 = vdwg.mxu0
        %1428 = vmatpush.bf16.msra.mxu0 0
        %1429 = vmatpush.bf16.msra.mxu0 0
        %1430 = vmatpush.bf16.msra.mxu0 0
        %1431 = vmatpush.bf16.msra.mxu0 0
        %1432 = vmatpush.bf16.msra.mxu0 %v1345
        %1433 = vmatpush.bf16.msra.mxu0 %v1287
        %1434 = vmatpush.bf16.msra.mxu0 %v1279
        %1435 = vmatpush.bf16.msra.mxu0 %v1271
        %1436 = vmatmul.bf16.gmra.mxu0 %v1323
        %v1437 = vpop.f32.mrf.mxu0
        %v1438 = vadd.f32 %v1179, %v1437
        %v1439 = vpop.f32.mrf.mxu0
        %1440 = vdwg.mxu0
        %1441 = vmatpush.bf16.msra.mxu0 0
        %1442 = vmatpush.bf16.msra.mxu0 0
        %1443 = vmatpush.bf16.msra.mxu0 0
        %1444 = vmatpush.bf16.msra.mxu0 0
        %1445 = vmatpush.bf16.msra.mxu0 %v1348
        %1446 = vmatpush.bf16.msra.mxu0 %v1288
        %1447 = vmatpush.bf16.msra.mxu0 %v1280
        %1448 = vmatpush.bf16.msra.mxu0 %v1272
        %1449 = vmatmul.bf16.gmra.mxu0 %v1323
        %v1450 = vpop.f32.mrf.mxu0
        %v1451 = vadd.f32 %v1179, %v1450
        %v1452 = vpop.f32.mrf.mxu0
        %1453 = vdwg.mxu0
        %v1454 = vmax.f32 %v1360, 0.0
        %v1455 = vmax.f32 %v1373, 0.0
        %v1456 = vmax.f32 %v1386, 0.0
        %v1457 = vmax.f32 %v1399, 0.0
        %v1458 = vmax.f32 %v1412, 0.0
        %v1459 = vmax.f32 %v1425, 0.0
        %v1460 = vmax.f32 %v1438, 0.0
        %v1461 = vmax.f32 %v1451, 0.0
        %1462 = vst [vmem:[%s293] sm:$0x1f] %v1454
        %1463 = vst [vmem:[%s293 + $0x8] sm:$0x1f] %v1455
        %1464 = vst [vmem:[%s293 + $0x10] sm:$0x1f] %v1456
        %1465 = vst [vmem:[%s293 + $0x18] sm:$0x1f] %v1457
        %1466 = vst [vmem:[%s293 + $0x20] sm:$0x1f] %v1458
        %1467 = vst [vmem:[%s293 + $0x28] sm:$0x1f] %v1459
        %1468 = vst [vmem:[%s293 + $0x30] sm:$0x1f] %v1460
        %1469 = vst [vmem:[%s293 + $0x38] sm:$0x1f] %v1461
        %s1470 = smul.u32 8, %s26
        %p1471 = scmp.lt.s32.totalorder %s25, 1
        %s1472 = scalar_select %p1471, %s25, 1
        %p1473 = scmp.lt.s32.totalorder %s1470, 31
        %s1474 = scalar_select %p1473, %s1470, 31
        %s1475 = smul.addr %s1472, 32
        %s1476 = sadd.s32 %s1474, %s1475
        %s1477 = smul.addr %s1476, 8
        %s1478 = scalar_lea.vmem %s4, %s1477
        // Predicated region
        $region45: #{tpu_custom_call.1} parent=35 // pred_check
          %p1479 = pneg %p153
        $region46: #{tpu_custom_call.1} parent=35 // pred_check_branch
          %1481 = sbr.rel (%p1479) target = $region48
        $region47: #{tpu_custom_call.1} parent=35 // pred_region
          %s1482 = smul.u32 8, %s26
        $region48: #{tpu_custom_call.1} parent=35 // pred_fallthru
          _
      $region36: #{tpu_custom_call.1} parent=5 // pred_fallthru
        _
      %p1483 = scmp.le.s32.totalorder 2, %s16
      // Predicated region
      $region49: #{tpu_custom_call.1} parent=5 // pred_check
        %p1484 = pneg %p1483
      $region50: #{tpu_custom_call.1} parent=5 // pred_check_branch
        %1486 = sbr.rel (%p1484) target = $region52
      $region51: #{tpu_custom_call.1} parent=5 // pred_region
        %s1487 = ssub.s32 %s16, 2
        // Predicated region
        $region53: #{tpu_custom_call.1} parent=51 // pred_check
          %p1488 = pneg %p159
        $region54: #{tpu_custom_call.1} parent=51 // pred_check_branch
          %1490 = sbr.rel (%p1488) target = $region56
        $region55: #{tpu_custom_call.1} parent=51 // pred_region
          %s1491 = smul.u32 8, %s28
          %p1492 = scmp.lt.s32.totalorder %s27, 1
          %s1493 = scalar_select %p1492, %s27, 1
          %p1494 = scmp.lt.s32.totalorder %s1491, 31
          %s1495 = scalar_select %p1494, %s1491, 31
          %s1496 = smul.addr %s1493, 32
          %s1497 = sadd.s32 %s1495, %s1496
          %s1498 = smul.addr %s1497, 8
          %s1499 = scalar_lea.vmem %s4, %s1498
        $region56: #{tpu_custom_call.1} parent=51 // pred_fallthru
          _
      $region52: #{tpu_custom_call.1} parent=5 // pred_fallthru
        _
    $region6: #{tpu_custom_call.1} parent=1 // loop_footer
      %s20 = sadd.s32 1, %s16
    $region7: #{tpu_custom_call.1} parent=1 // loop_footer_branch
      %15 = sbr.rel target = $region3
    $region8: #{tpu_custom_call.1} parent=1 // loop_exit
      _
    %1500 = vsyncpa [#allocation4], 1
    %s1501 = scalar_lea.sflag [#allocation4], 1
    %1502 = vsyncpa %s1501, 1
    %1503 = vsyncpa [#allocation6], 1
    %s1504 = scalar_lea.sflag [#allocation6], 1
    %1505 = vsyncpa %s1504, 1

</llo_original>
